<compile_context>
chip_gen: v7x
topology: tpu7x:2x2x1
jax: 0.10.0
libtpu: 0.0.40
codegen_flags: <defaults>
</compile_context>

<pallas_src>
import jax
import jax.numpy as jnp
from jax import lax
from jax.experimental import pallas as pl
from jax.experimental.pallas import tpu as pltpu


# ----------------------------- Pallas kernel -------------------------------

def gnn_fused_kernel(tok_ref, embwih_ref, whh_ref, bih_ref, bhhn_ref, typ_ref,
                     w1h_ref, w1t_ref, b1_ref, w2_ref, b2_ref,
                     o_ref, gi_ref):
    """Embedding + both GRUs + type select + classification head, one launch.

    Lane layout (HP = padded per-GRU slot, GH2 = 2*HP, C = 3*GH2):
      gi/gh columns: [ r_map | r_mem | z_map | z_mem | n_map | n_mem ], each
      GRU slot HP lanes wide (first H real, rest zero) so every gate slice
      starts on a 128-lane boundary.
      h columns:     [ h_map | h_mem ]  (N, GH2), same per-slot layout.

    tok_ref:    (T*N, 1)  int32 time-major token ids (row = t*N + n)
    embwih_ref: (V, C)    bf16  embedding table folded into packed W_ih
    whh_ref:    (GH2, C)  bf16  packed block-diagonal W_hh
    bih_ref:    (1, C)    f32   b_ih (+ b_hh for r/z gates folded in)
    bhhn_ref:   (1, GH2)  f32   n-gate hidden bias
    typ_ref:    (N, 6)    f32   node type one-hots
    w1h_ref:    (HP, FP)  bf16  lin1 weights for the hidden features
    w1t_ref:    (6, FP)   bf16  lin1 weights for the type features
    b1_ref:     (1, FP)   f32
    w2_ref:     (FP, FP)  bf16
    b2_ref:     (1, FP)   f32
    o_ref:      (N, FP)   f32   logits for every node (real logits at [:, :2])
    gi_ref:     (T*N, C)  f32   VMEM scratch: precomputed input projection
    """
    TN, _ = gi_ref.shape
    GH2 = whh_ref.shape[0]
    HP = GH2 // 2
    N = typ_ref.shape[0]
    T = TN // N
    V = embwih_ref.shape[0]

    # (1) Embedding lookup + input projection for ALL timesteps as one tiny
    #     MXU matmul: one-hot(tokens) @ (emb @ W_ih).  r/z hidden biases are
    #     already folded into bih, so no bias add remains on those gates in
    #     the recurrence.
    onehot = (tok_ref[...] ==
              lax.broadcasted_iota(jnp.int32, (TN, V), 1)).astype(jnp.bfloat16)
    gi_ref[...] = jnp.dot(onehot, embwih_ref[...],
                          preferred_element_type=jnp.float32) + bih_ref[...]

    # Hoist the n-gate hidden-bias broadcast out of the recurrence.
    bhh_n = jnp.broadcast_to(bhhn_ref[...], (N, GH2))

    def step(t, h):
        gi = gi_ref[pl.ds(t * N, N), :]                             # (N, C)
        gh = jnp.dot(h.astype(jnp.bfloat16), whh_ref[...],
                     preferred_element_type=jnp.float32)            # (N, C)
        # 128-lane-aligned gate slices (gate-major layout).
        i_r, i_z, i_n = gi[:, 0:GH2], gi[:, GH2:2 * GH2], gi[:, 2 * GH2:3 * GH2]
        h_r, h_z, h_n = gh[:, 0:GH2], gh[:, GH2:2 * GH2], gh[:, 2 * GH2:3 * GH2]
        r = jax.nn.sigmoid(i_r + h_r)
        z = jax.nn.sigmoid(i_z + h_z)
        n = jnp.tanh(i_n + r * (h_n + bhh_n))
        return (1.0 - z) * n + z * h

    h0 = jnp.zeros((N, GH2), dtype=jnp.float32)
    # (2) Fully unroll the short, latency-bound recurrence (T is static).
    h = lax.fori_loop(0, T, step, h0, unroll=True)

    # (3) Fused epilogue: type-conditional GRU select + lin1 -> ReLU -> lin2.
    #     lin1 is linear, so the (type, hidden) concat is decomposed into two
    #     matmuls; padding lanes of h stay zero through the recurrence.
    typ = typ_ref[...]
    is_map = (typ[:, 0:1] == 1.0).astype(jnp.float32)
    is_mem = (typ[:, 5:6] == 1.0).astype(jnp.float32) * (1.0 - is_map)
    h_sel = h[:, 0:HP] * is_map + h[:, HP:GH2] * is_mem             # (N, HP)
    a = (jnp.dot(h_sel.astype(jnp.bfloat16), w1h_ref[...],
                 preferred_element_type=jnp.float32)
         + jnp.dot(typ.astype(jnp.bfloat16), w1t_ref[...],
                   preferred_element_type=jnp.float32)
         + b1_ref[...])
    a = jnp.maximum(a, 0.0)
    o_ref[...] = jnp.dot(a.astype(jnp.bfloat16), w2_ref[...],
                         preferred_element_type=jnp.float32) + b2_ref[...]


# ------------------------------ wrapper -------------------------------------

def _round_up(v, m):
    return ((v + m - 1) // m) * m


def run_gnn_fused(tok_tm, embwih, whh, bih, bhhn, typ6, w1h, w1t, b1, w2, b2):
    tn = tok_tm.shape[0]
    c = whh.shape[1]
    n_pad = typ6.shape[0]
    fp = w2.shape[1]
    vmem_spec = pl.BlockSpec(memory_space=pltpu.MemorySpace.VMEM)
    return pl.pallas_call(
        gnn_fused_kernel,
        out_shape=jax.ShapeDtypeStruct((n_pad, fp), jnp.float32),
        # Single invocation, whole arrays resident in VMEM: no grid, no
        # double-buffering (nothing to overlap with).
        in_specs=[vmem_spec] * 11,
        out_specs=vmem_spec,
        scratch_shapes=[pltpu.VMEM((tn, c), jnp.float32)],
        # Deliberate VMEM budget (tiny here; revisit when T*N*C grows — v7x
        # has 64 MiB physical VMEM).
        compiler_params=pltpu.CompilerParams(vmem_limit_bytes=32 * 1024 * 1024),
    )(tok_tm, embwih, whh, bih, bhhn, typ6, w1h, w1t, b1, w2, b2)


# ------------------------------ model ---------------------------------------

class GNNPallas:
    def __init__(self, dim_in, embedding_dim=32, dim_hidden=32, num_layers=1,
                 seed=0):
        assert num_layers == 1
        self.dim_in = dim_in
        self.embedding_dim = embedding_dim
        self.dim_hidden = dim_hidden

        H = dim_hidden
        E = embedding_dim
        V = dim_in
        F = H + 6
        HP = _round_up(max(H, 1), 64)      # padded per-GRU slot width
        GH2 = 2 * HP                       # fused hidden width (map | mem)
        C = 3 * GH2                        # fused gate width (r | z | n)
        FP = 128                           # lane-dense head width
        assert F <= FP
        self.HP, self.GH2, self.C, self.FP = HP, GH2, C, FP

        key = jax.random.PRNGKey(seed)
        ks = jax.random.split(key, 12)
        k = 1.0 / jnp.sqrt(jnp.float32(H))

        # nn.Embedding(dim_in, embedding_dim): N(0, 1)
        self.emb = jax.random.normal(ks[0], (V, E), jnp.float32)

        # nn.GRU(E, H): U(-1/sqrt(H), 1/sqrt(H)), gate order r, z, n.
        def gru_params(k0, k1, k2, k3):
            return dict(
                w_ih=jax.random.uniform(k0, (3 * H, E), jnp.float32, -k, k),
                w_hh=jax.random.uniform(k1, (3 * H, H), jnp.float32, -k, k),
                b_ih=jax.random.uniform(k2, (3 * H,), jnp.float32, -k, k),
                b_hh=jax.random.uniform(k3, (3 * H,), jnp.float32, -k, k),
            )

        self.map_gru = gru_params(ks[1], ks[2], ks[3], ks[4])
        self.memlet_gru = gru_params(ks[5], ks[6], ks[7], ks[8])

        # lin1 / lin2: uniform_(0, 1) weights, zero bias (as in module __init__)
        self.lin1_w = jax.random.uniform(ks[9], (F, F), jnp.float32, 0.0, 1.0)
        self.lin1_b = jnp.zeros((F,), jnp.float32)
        self.lin2_w = jax.random.uniform(ks[10], (2, F), jnp.float32, 0.0, 1.0)
        self.lin2_b = jnp.zeros((2,), jnp.float32)

        # ---- pack both GRUs into one gate-major, lane-aligned weight set ----
        wih = jnp.zeros((E, C), jnp.float32)
        whh = jnp.zeros((GH2, C), jnp.float32)
        bih = jnp.zeros((1, C), jnp.float32)
        bhhn = jnp.zeros((1, GH2), jnp.float32)
        for g, p in enumerate((self.map_gru, self.memlet_gru)):
            for gate in range(3):          # r, z, n
                col = gate * GH2 + g * HP
                rows = slice(gate * H, (gate + 1) * H)
                wih = wih.at[:, col:col + H].set(p["w_ih"][rows, :].T)
                whh = whh.at[g * HP:g * HP + H, col:col + H].set(
                    p["w_hh"][rows, :].T)
                b = p["b_ih"][rows]
                if gate < 2:               # fold b_hh into bih for r, z gates
                    b = b + p["b_hh"][rows]
                bih = bih.at[0, col:col + H].set(b)
            bhhn = bhhn.at[0, g * HP:g * HP + H].set(p["b_hh"][2 * H:3 * H])

        # Fold the embedding table into the input projection: one-hot(tok) @
        # (emb @ W_ih) == embed(tok) @ W_ih.
        self.embwih = (self.emb @ wih).astype(jnp.bfloat16)       # (V, C)
        self.whh_c = whh.astype(jnp.bfloat16)                     # (GH2, C)
        self.bih_c = bih                                          # (1, C)
        self.bhhn_c = bhhn                                        # (1, GH2)

        # ---- head weights re-indexed to the padded rep layout ---------------
        # Original lin1 input is [type(6), hidden(H)]; here it is decomposed
        # into two matmuls (type part + selected-hidden part).
        w1t_full = self.lin1_w.T                                  # (F, F)
        w1h = jnp.zeros((HP, FP), jnp.float32).at[0:H, 0:F].set(
            w1t_full[6:6 + H, :])
        w1typ = jnp.zeros((6, FP), jnp.float32).at[0:6, 0:F].set(
            w1t_full[0:6, :])
        self.w1h = w1h.astype(jnp.bfloat16)
        self.w1typ = w1typ.astype(jnp.bfloat16)
        self.b1p = jnp.zeros((1, FP), jnp.float32).at[0, 0:F].set(self.lin1_b)
        self.w2p = jnp.zeros((FP, FP), jnp.float32).at[0:F, 0:2].set(
            self.lin2_w.T).astype(jnp.bfloat16)
        self.b2p = jnp.zeros((1, FP), jnp.float32).at[0, 0:2].set(self.lin2_b)

        self._fwd = jax.jit(self._forward)

    # ------------------------------------------------------------------ #
    def _forward(self, token_ids, types, target_nodes):
        N, T = token_ids.shape
        N_pad = _round_up(N, 8)

        # Integer/tiny glue only: pad ids + types, time-major flatten of ids.
        tok = jnp.zeros((N_pad, T), jnp.int32).at[:N].set(token_ids)
        tok_tm = tok.T.reshape(T * N_pad, 1)                     # row = t*N + n
        typ6 = jnp.zeros((N_pad, 6), jnp.float32).at[:N].set(types)

        # TODO(synk): ptgnn message-passing GNN (MlpMessagePassingLayer, max
        # aggregation) internals are not provided; identity pass-through here.
        logits_pad = run_gnn_fused(
            tok_tm, self.embwih, self.whh_c, self.bih_c, self.bhhn_c, typ6,
            self.w1h, self.w1typ, self.b1p, self.w2p, self.b2p)  # (N_pad, FP)

        return logits_pad[target_nodes, :2]

    def forward(self, token_ids, types, target_nodes):
        return self._fwd(token_ids, types, target_nodes)


# ------------------------------ main ----------------------------------------

if __name__ == "__main__":
    dim_in = 16          # vocab size
    embedding_dim = 32
    dim_hidden = 32
    N_nodes = 8
    T_tokens = 8

    model = GNNPallas(dim_in, embedding_dim=embedding_dim,
                      dim_hidden=dim_hidden, num_layers=1, seed=0)

    key = jax.random.PRNGKey(0)
    k_tok, k_type = jax.random.split(key)
    token_ids = jax.random.randint(k_tok, (N_nodes, T_tokens), 0, dim_in,
                                   jnp.int32)

    # Node type one-hots: cycle through "map" (Type[0]=1), "memlet" (Type[5]=1),
    # and "other".
    type_rows = []
    for i in range(N_nodes):
        row = [0.0] * 6
        if i % 3 == 0:
            row[0] = 1.0
        elif i % 3 == 1:
            row[5] = 1.0
        else:
            row[2] = 1.0
        type_rows.append(row)
    types = jnp.asarray(type_rows, jnp.float32)               # (N, 6)

    target_nodes = jnp.asarray([0, 1, 3, 5], jnp.int32)

    out = model.forward(token_ids, types, target_nodes)
    out = jax.block_until_ready(out)
    assert out.shape == (4, 2) and out.dtype == jnp.float32
    assert bool(jnp.all(jnp.isfinite(out)))
    print("KERNEL_OK")
</pallas_src>

<mosaic_0001>
module attributes {stable_mosaic.version = 11 : i64} {
  func.func @gnn_fused_kernel(%arg0: memref<64x1xi32, #tpu.memory_space<vmem>>, %arg1: memref<16x384xbf16, #tpu.memory_space<vmem>>, %arg2: memref<128x384xbf16, #tpu.memory_space<vmem>>, %arg3: memref<1x384xf32, #tpu.memory_space<vmem>>, %arg4: memref<1x128xf32, #tpu.memory_space<vmem>>, %arg5: memref<8x6xf32, #tpu.memory_space<vmem>>, %arg6: memref<64x128xbf16, #tpu.memory_space<vmem>>, %arg7: memref<6x128xbf16, #tpu.memory_space<vmem>>, %arg8: memref<1x128xf32, #tpu.memory_space<vmem>>, %arg9: memref<128x128xbf16, #tpu.memory_space<vmem>>, %arg10: memref<1x128xf32, #tpu.memory_space<vmem>>, %arg11: memref<8x128xf32, #tpu.memory_space<vmem>>, %arg12: memref<64x384xf32, #tpu.memory_space<vmem>>) attributes {dimension_semantics = [], scalar_prefetch = 0 : i64, scratch_operands = 1 : i64, tpu.core_type = #tpu.core_type<tc>} {
    %c0 = arith.constant 0 : index
    %c0_0 = arith.constant 0 : index
    %0 = vector.load %arg0[%c0, %c0_0] : memref<64x1xi32, #tpu.memory_space<vmem>>, vector<64x1xi32>
    %1 = tpu.iota {dimensions = array<i32: 1>} : vector<64x16xi32>
    %2 = vector.broadcast %0 : vector<64x1xi32> to vector<64x16xi32>
    %3 = arith.cmpi eq, %2, %1 : vector<64x16xi32>
    %4 = arith.extui %3 : vector<64x16xi1> to vector<64x16xi32>
    %5 = arith.sitofp %4 : vector<64x16xi32> to vector<64x16xf32>
    %6 = arith.truncf %5 : vector<64x16xf32> to vector<64x16xbf16>
    %c0_1 = arith.constant 0 : index
    %c0_2 = arith.constant 0 : index
    %7 = vector.load %arg1[%c0_1, %c0_2] : memref<16x384xbf16, #tpu.memory_space<vmem>>, vector<16x384xbf16>
    %cst = arith.constant dense<0.000000e+00> : vector<64x384xf32>
    %8 = tpu.matmul %6, %7, %cst {dimension_numbers = #tpu.dot_dimension_numbers<[1], [0], [0], [1], [0, 0, 1, 1], [], []>} : vector<64x16xbf16>, vector<16x384xbf16>, vector<64x384xf32> -> vector<64x384xf32>
    %c0_3 = arith.constant 0 : index
    %c0_4 = arith.constant 0 : index
    %9 = vector.load %arg3[%c0_3, %c0_4] : memref<1x384xf32, #tpu.memory_space<vmem>>, vector<1x384xf32>
    %10 = vector.broadcast %9 : vector<1x384xf32> to vector<64x384xf32>
    %11 = arith.addf %8, %10 : vector<64x384xf32>
    %c0_5 = arith.constant 0 : index
    %c0_6 = arith.constant 0 : index
    %12 = vector.load %arg12[%c0_5, %c0_6] : memref<64x384xf32, #tpu.memory_space<vmem>>, vector<64x384xf32>
    tpu.vector_store %arg12[%c0_5, %c0_6], %11 {strides = array<i32>} : memref<64x384xf32, #tpu.memory_space<vmem>>, vector<64x384xf32>,
    %c0_7 = arith.constant 0 : index
    %c0_8 = arith.constant 0 : index
    %13 = vector.load %arg4[%c0_7, %c0_8] : memref<1x128xf32, #tpu.memory_space<vmem>>, vector<1x128xf32>
    %14 = vector.shape_cast %13 : vector<1x128xf32> to vector<1x128xf32>
    %15 = vector.broadcast %14 : vector<1x128xf32> to vector<8x128xf32>
    %cst_9 = arith.constant 0.000000e+00 : f32
    %16 = vector.broadcast %cst_9 : f32 to vector<8x128xf32>
    %c0_i32 = arith.constant 0 : i32
    %c8_i32 = arith.constant 8 : i32
    %17 = arith.muli %c0_i32, %c8_i32 : i32
    %18 = arith.index_cast %17 : i32 to index
    %c0_10 = arith.constant 0 : index
    %19 = vector.load %arg12[%18, %c0_10] : memref<64x384xf32, #tpu.memory_space<vmem>>, vector<8x384xf32>
    %20 = arith.truncf %16 : vector<8x128xf32> to vector<8x128xbf16>
    %c0_11 = arith.constant 0 : index
    %c0_12 = arith.constant 0 : index
    %21 = vector.load %arg2[%c0_11, %c0_12] : memref<128x384xbf16, #tpu.memory_space<vmem>>, vector<128x384xbf16>
    %cst_13 = arith.constant dense<0.000000e+00> : vector<8x384xf32>
    %22 = tpu.matmul %20, %21, %cst_13 {dimension_numbers = #tpu.dot_dimension_numbers<[1], [0], [0], [1], [0, 0, 1, 1], [], []>} : vector<8x128xbf16>, vector<128x384xbf16>, vector<8x384xf32> -> vector<8x384xf32>
    %23 = vector.extract_strided_slice %19 {offsets = [0, 0], sizes = [8, 128], strides = [1, 1]} : vector<8x384xf32> to vector<8x128xf32>
    %24 = vector.extract_strided_slice %19 {offsets = [0, 128], sizes = [8, 128], strides = [1, 1]} : vector<8x384xf32> to vector<8x128xf32>
    %25 = vector.extract_strided_slice %19 {offsets = [0, 256], sizes = [8, 128], strides = [1, 1]} : vector<8x384xf32> to vector<8x128xf32>
    %26 = vector.extract_strided_slice %22 {offsets = [0, 0], sizes = [8, 128], strides = [1, 1]} : vector<8x384xf32> to vector<8x128xf32>
    %27 = vector.extract_strided_slice %22 {offsets = [0, 128], sizes = [8, 128], strides = [1, 1]} : vector<8x384xf32> to vector<8x128xf32>
    %28 = vector.extract_strided_slice %22 {offsets = [0, 256], sizes = [8, 128], strides = [1, 1]} : vector<8x384xf32> to vector<8x128xf32>
    %29 = arith.addf %23, %26 : vector<8x128xf32>
    %30 = arith.negf %29 : vector<8x128xf32>
    %31 = math.exp %30 : vector<8x128xf32>
    %cst_14 = arith.constant 1.000000e+00 : f32
    %32 = vector.broadcast %cst_14 : f32 to vector<8x128xf32>
    %33 = arith.addf %32, %31 : vector<8x128xf32>
    %34 = arith.divf %32, %33 : vector<8x128xf32>
    %35 = arith.addf %24, %27 : vector<8x128xf32>
    %36 = arith.negf %35 : vector<8x128xf32>
    %37 = math.exp %36 : vector<8x128xf32>
    %cst_15 = arith.constant 1.000000e+00 : f32
    %38 = vector.broadcast %cst_15 : f32 to vector<8x128xf32>
    %39 = arith.addf %38, %37 : vector<8x128xf32>
    %40 = arith.divf %38, %39 : vector<8x128xf32>
    %41 = arith.addf %28, %15 : vector<8x128xf32>
    %42 = arith.mulf %34, %41 : vector<8x128xf32>
    %43 = arith.addf %25, %42 : vector<8x128xf32>
    %44 = math.tanh %43 : vector<8x128xf32>
    %cst_16 = arith.constant 1.000000e+00 : f32
    %45 = vector.broadcast %cst_16 : f32 to vector<8x128xf32>
    %46 = arith.subf %45, %40 : vector<8x128xf32>
    %47 = arith.mulf %46, %44 : vector<8x128xf32>
    %48 = arith.mulf %40, %16 : vector<8x128xf32>
    %49 = arith.addf %47, %48 : vector<8x128xf32>
    %c1_i32 = arith.constant 1 : i32
    %c8_i32_17 = arith.constant 8 : i32
    %50 = arith.muli %c1_i32, %c8_i32_17 : i32
    %51 = arith.index_cast %50 : i32 to index
    %c0_18 = arith.constant 0 : index
    %52 = vector.load %arg12[%51, %c0_18] : memref<64x384xf32, #tpu.memory_space<vmem>>, vector<8x384xf32>
    %53 = arith.truncf %49 : vector<8x128xf32> to vector<8x128xbf16>
    %c0_19 = arith.constant 0 : index
    %c0_20 = arith.constant 0 : index
    %54 = vector.load %arg2[%c0_19, %c0_20] : memref<128x384xbf16, #tpu.memory_space<vmem>>, vector<128x384xbf16>
    %cst_21 = arith.constant dense<0.000000e+00> : vector<8x384xf32>
    %55 = tpu.matmul %53, %54, %cst_21 {dimension_numbers = #tpu.dot_dimension_numbers<[1], [0], [0], [1], [0, 0, 1, 1], [], []>} : vector<8x128xbf16>, vector<128x384xbf16>, vector<8x384xf32> -> vector<8x384xf32>
    %56 = vector.extract_strided_slice %52 {offsets = [0, 0], sizes = [8, 128], strides = [1, 1]} : vector<8x384xf32> to vector<8x128xf32>
    %57 = vector.extract_strided_slice %52 {offsets = [0, 128], sizes = [8, 128], strides = [1, 1]} : vector<8x384xf32> to vector<8x128xf32>
    %58 = vector.extract_strided_slice %52 {offsets = [0, 256], sizes = [8, 128], strides = [1, 1]} : vector<8x384xf32> to vector<8x128xf32>
    %59 = vector.extract_strided_slice %55 {offsets = [0, 0], sizes = [8, 128], strides = [1, 1]} : vector<8x384xf32> to vector<8x128xf32>
    %60 = vector.extract_strided_slice %55 {offsets = [0, 128], sizes = [8, 128], strides = [1, 1]} : vector<8x384xf32> to vector<8x128xf32>
    %61 = vector.extract_strided_slice %55 {offsets = [0, 256], sizes = [8, 128], strides = [1, 1]} : vector<8x384xf32> to vector<8x128xf32>
    %62 = arith.addf %56, %59 : vector<8x128xf32>
    %63 = arith.negf %62 : vector<8x128xf32>
    %64 = math.exp %63 : vector<8x128xf32>
    %cst_22 = arith.constant 1.000000e+00 : f32
    %65 = vector.broadcast %cst_22 : f32 to vector<8x128xf32>
    %66 = arith.addf %65, %64 : vector<8x128xf32>
    %67 = arith.divf %65, %66 : vector<8x128xf32>
    %68 = arith.addf %57, %60 : vector<8x128xf32>
    %69 = arith.negf %68 : vector<8x128xf32>
    %70 = math.exp %69 : vector<8x128xf32>
    %cst_23 = arith.constant 1.000000e+00 : f32
    %71 = vector.broadcast %cst_23 : f32 to vector<8x128xf32>
    %72 = arith.addf %71, %70 : vector<8x128xf32>
    %73 = arith.divf %71, %72 : vector<8x128xf32>
    %74 = arith.addf %61, %15 : vector<8x128xf32>
    %75 = arith.mulf %67, %74 : vector<8x128xf32>
    %76 = arith.addf %58, %75 : vector<8x128xf32>
    %77 = math.tanh %76 : vector<8x128xf32>
    %cst_24 = arith.constant 1.000000e+00 : f32
    %78 = vector.broadcast %cst_24 : f32 to vector<8x128xf32>
    %79 = arith.subf %78, %73 : vector<8x128xf32>
    %80 = arith.mulf %79, %77 : vector<8x128xf32>
    %81 = arith.mulf %73, %49 : vector<8x128xf32>
    %82 = arith.addf %80, %81 : vector<8x128xf32>
    %c2_i32 = arith.constant 2 : i32
    %c8_i32_25 = arith.constant 8 : i32
    %83 = arith.muli %c2_i32, %c8_i32_25 : i32
    %84 = arith.index_cast %83 : i32 to index
    %c0_26 = arith.constant 0 : index
    %85 = vector.load %arg12[%84, %c0_26] : memref<64x384xf32, #tpu.memory_space<vmem>>, vector<8x384xf32>
    %86 = arith.truncf %82 : vector<8x128xf32> to vector<8x128xbf16>
    %c0_27 = arith.constant 0 : index
    %c0_28 = arith.constant 0 : index
    %87 = vector.load %arg2[%c0_27, %c0_28] : memref<128x384xbf16, #tpu.memory_space<vmem>>, vector<128x384xbf16>
    %cst_29 = arith.constant dense<0.000000e+00> : vector<8x384xf32>
    %88 = tpu.matmul %86, %87, %cst_29 {dimension_numbers = #tpu.dot_dimension_numbers<[1], [0], [0], [1], [0, 0, 1, 1], [], []>} : vector<8x128xbf16>, vector<128x384xbf16>, vector<8x384xf32> -> vector<8x384xf32>
    %89 = vector.extract_strided_slice %85 {offsets = [0, 0], sizes = [8, 128], strides = [1, 1]} : vector<8x384xf32> to vector<8x128xf32>
    %90 = vector.extract_strided_slice %85 {offsets = [0, 128], sizes = [8, 128], strides = [1, 1]} : vector<8x384xf32> to vector<8x128xf32>
    %91 = vector.extract_strided_slice %85 {offsets = [0, 256], sizes = [8, 128], strides = [1, 1]} : vector<8x384xf32> to vector<8x128xf32>
    %92 = vector.extract_strided_slice %88 {offsets = [0, 0], sizes = [8, 128], strides = [1, 1]} : vector<8x384xf32> to vector<8x128xf32>
    %93 = vector.extract_strided_slice %88 {offsets = [0, 128], sizes = [8, 128], strides = [1, 1]} : vector<8x384xf32> to vector<8x128xf32>
    %94 = vector.extract_strided_slice %88 {offsets = [0, 256], sizes = [8, 128], strides = [1, 1]} : vector<8x384xf32> to vector<8x128xf32>
    %95 = arith.addf %89, %92 : vector<8x128xf32>
    %96 = arith.negf %95 : vector<8x128xf32>
    %97 = math.exp %96 : vector<8x128xf32>
    %cst_30 = arith.constant 1.000000e+00 : f32
    %98 = vector.broadcast %cst_30 : f32 to vector<8x128xf32>
    %99 = arith.addf %98, %97 : vector<8x128xf32>
    %100 = arith.divf %98, %99 : vector<8x128xf32>
    %101 = arith.addf %90, %93 : vector<8x128xf32>
    %102 = arith.negf %101 : vector<8x128xf32>
    %103 = math.exp %102 : vector<8x128xf32>
    %cst_31 = arith.constant 1.000000e+00 : f32
    %104 = vector.broadcast %cst_31 : f32 to vector<8x128xf32>
    %105 = arith.addf %104, %103 : vector<8x128xf32>
    %106 = arith.divf %104, %105 : vector<8x128xf32>
    %107 = arith.addf %94, %15 : vector<8x128xf32>
    %108 = arith.mulf %100, %107 : vector<8x128xf32>
    %109 = arith.addf %91, %108 : vector<8x128xf32>
    %110 = math.tanh %109 : vector<8x128xf32>
    %cst_32 = arith.constant 1.000000e+00 : f32
    %111 = vector.broadcast %cst_32 : f32 to vector<8x128xf32>
    %112 = arith.subf %111, %106 : vector<8x128xf32>
    %113 = arith.mulf %112, %110 : vector<8x128xf32>
    %114 = arith.mulf %106, %82 : vector<8x128xf32>
    %115 = arith.addf %113, %114 : vector<8x128xf32>
    %c3_i32 = arith.constant 3 : i32
    %c8_i32_33 = arith.constant 8 : i32
    %116 = arith.muli %c3_i32, %c8_i32_33 : i32
    %117 = arith.index_cast %116 : i32 to index
    %c0_34 = arith.constant 0 : index
    %118 = vector.load %arg12[%117, %c0_34] : memref<64x384xf32, #tpu.memory_space<vmem>>, vector<8x384xf32>
    %119 = arith.truncf %115 : vector<8x128xf32> to vector<8x128xbf16>
    %c0_35 = arith.constant 0 : index
    %c0_36 = arith.constant 0 : index
    %120 = vector.load %arg2[%c0_35, %c0_36] : memref<128x384xbf16, #tpu.memory_space<vmem>>, vector<128x384xbf16>
    %cst_37 = arith.constant dense<0.000000e+00> : vector<8x384xf32>
    %121 = tpu.matmul %119, %120, %cst_37 {dimension_numbers = #tpu.dot_dimension_numbers<[1], [0], [0], [1], [0, 0, 1, 1], [], []>} : vector<8x128xbf16>, vector<128x384xbf16>, vector<8x384xf32> -> vector<8x384xf32>
    %122 = vector.extract_strided_slice %118 {offsets = [0, 0], sizes = [8, 128], strides = [1, 1]} : vector<8x384xf32> to vector<8x128xf32>
    %123 = vector.extract_strided_slice %118 {offsets = [0, 128], sizes = [8, 128], strides = [1, 1]} : vector<8x384xf32> to vector<8x128xf32>
    %124 = vector.extract_strided_slice %118 {offsets = [0, 256], sizes = [8, 128], strides = [1, 1]} : vector<8x384xf32> to vector<8x128xf32>
    %125 = vector.extract_strided_slice %121 {offsets = [0, 0], sizes = [8, 128], strides = [1, 1]} : vector<8x384xf32> to vector<8x128xf32>
    %126 = vector.extract_strided_slice %121 {offsets = [0, 128], sizes = [8, 128], strides = [1, 1]} : vector<8x384xf32> to vector<8x128xf32>
    %127 = vector.extract_strided_slice %121 {offsets = [0, 256], sizes = [8, 128], strides = [1, 1]} : vector<8x384xf32> to vector<8x128xf32>
    %128 = arith.addf %122, %125 : vector<8x128xf32>
    %129 = arith.negf %128 : vector<8x128xf32>
    %130 = math.exp %129 : vector<8x128xf32>
    %cst_38 = arith.constant 1.000000e+00 : f32
    %131 = vector.broadcast %cst_38 : f32 to vector<8x128xf32>
    %132 = arith.addf %131, %130 : vector<8x128xf32>
    %133 = arith.divf %131, %132 : vector<8x128xf32>
    %134 = arith.addf %123, %126 : vector<8x128xf32>
    %135 = arith.negf %134 : vector<8x128xf32>
    %136 = math.exp %135 : vector<8x128xf32>
    %cst_39 = arith.constant 1.000000e+00 : f32
    %137 = vector.broadcast %cst_39 : f32 to vector<8x128xf32>
    %138 = arith.addf %137, %136 : vector<8x128xf32>
    %139 = arith.divf %137, %138 : vector<8x128xf32>
    %140 = arith.addf %127, %15 : vector<8x128xf32>
    %141 = arith.mulf %133, %140 : vector<8x128xf32>
    %142 = arith.addf %124, %141 : vector<8x128xf32>
    %143 = math.tanh %142 : vector<8x128xf32>
    %cst_40 = arith.constant 1.000000e+00 : f32
    %144 = vector.broadcast %cst_40 : f32 to vector<8x128xf32>
    %145 = arith.subf %144, %139 : vector<8x128xf32>
    %146 = arith.mulf %145, %143 : vector<8x128xf32>
    %147 = arith.mulf %139, %115 : vector<8x128xf32>
    %148 = arith.addf %146, %147 : vector<8x128xf32>
    %c4_i32 = arith.constant 4 : i32
    %c8_i32_41 = arith.constant 8 : i32
    %149 = arith.muli %c4_i32, %c8_i32_41 : i32
    %150 = arith.index_cast %149 : i32 to index
    %c0_42 = arith.constant 0 : index
    %151 = vector.load %arg12[%150, %c0_42] : memref<64x384xf32, #tpu.memory_space<vmem>>, vector<8x384xf32>
    %152 = arith.truncf %148 : vector<8x128xf32> to vector<8x128xbf16>
    %c0_43 = arith.constant 0 : index
    %c0_44 = arith.constant 0 : index
    %153 = vector.load %arg2[%c0_43, %c0_44] : memref<128x384xbf16, #tpu.memory_space<vmem>>, vector<128x384xbf16>
    %cst_45 = arith.constant dense<0.000000e+00> : vector<8x384xf32>
    %154 = tpu.matmul %152, %153, %cst_45 {dimension_numbers = #tpu.dot_dimension_numbers<[1], [0], [0], [1], [0, 0, 1, 1], [], []>} : vector<8x128xbf16>, vector<128x384xbf16>, vector<8x384xf32> -> vector<8x384xf32>
    %155 = vector.extract_strided_slice %151 {offsets = [0, 0], sizes = [8, 128], strides = [1, 1]} : vector<8x384xf32> to vector<8x128xf32>
    %156 = vector.extract_strided_slice %151 {offsets = [0, 128], sizes = [8, 128], strides = [1, 1]} : vector<8x384xf32> to vector<8x128xf32>
    %157 = vector.extract_strided_slice %151 {offsets = [0, 256], sizes = [8, 128], strides = [1, 1]} : vector<8x384xf32> to vector<8x128xf32>
    %158 = vector.extract_strided_slice %154 {offsets = [0, 0], sizes = [8, 128], strides = [1, 1]} : vector<8x384xf32> to vector<8x128xf32>
    %159 = vector.extract_strided_slice %154 {offsets = [0, 128], sizes = [8, 128], strides = [1, 1]} : vector<8x384xf32> to vector<8x128xf32>
    %160 = vector.extract_strided_slice %154 {offsets = [0, 256], sizes = [8, 128], strides = [1, 1]} : vector<8x384xf32> to vector<8x128xf32>
    %161 = arith.addf %155, %158 : vector<8x128xf32>
    %162 = arith.negf %161 : vector<8x128xf32>
    %163 = math.exp %162 : vector<8x128xf32>
    %cst_46 = arith.constant 1.000000e+00 : f32
    %164 = vector.broadcast %cst_46 : f32 to vector<8x128xf32>
    %165 = arith.addf %164, %163 : vector<8x128xf32>
    %166 = arith.divf %164, %165 : vector<8x128xf32>
    %167 = arith.addf %156, %159 : vector<8x128xf32>
    %168 = arith.negf %167 : vector<8x128xf32>
    %169 = math.exp %168 : vector<8x128xf32>
    %cst_47 = arith.constant 1.000000e+00 : f32
    %170 = vector.broadcast %cst_47 : f32 to vector<8x128xf32>
    %171 = arith.addf %170, %169 : vector<8x128xf32>
    %172 = arith.divf %170, %171 : vector<8x128xf32>
    %173 = arith.addf %160, %15 : vector<8x128xf32>
    %174 = arith.mulf %166, %173 : vector<8x128xf32>
    %175 = arith.addf %157, %174 : vector<8x128xf32>
    %176 = math.tanh %175 : vector<8x128xf32>
    %cst_48 = arith.constant 1.000000e+00 : f32
    %177 = vector.broadcast %cst_48 : f32 to vector<8x128xf32>
    %178 = arith.subf %177, %172 : vector<8x128xf32>
    %179 = arith.mulf %178, %176 : vector<8x128xf32>
    %180 = arith.mulf %172, %148 : vector<8x128xf32>
    %181 = arith.addf %179, %180 : vector<8x128xf32>
    %c5_i32 = arith.constant 5 : i32
    %c8_i32_49 = arith.constant 8 : i32
    %182 = arith.muli %c5_i32, %c8_i32_49 : i32
    %183 = arith.index_cast %182 : i32 to index
    %c0_50 = arith.constant 0 : index
    %184 = vector.load %arg12[%183, %c0_50] : memref<64x384xf32, #tpu.memory_space<vmem>>, vector<8x384xf32>
    %185 = arith.truncf %181 : vector<8x128xf32> to vector<8x128xbf16>
    %c0_51 = arith.constant 0 : index
    %c0_52 = arith.constant 0 : index
    %186 = vector.load %arg2[%c0_51, %c0_52] : memref<128x384xbf16, #tpu.memory_space<vmem>>, vector<128x384xbf16>
    %cst_53 = arith.constant dense<0.000000e+00> : vector<8x384xf32>
    %187 = tpu.matmul %185, %186, %cst_53 {dimension_numbers = #tpu.dot_dimension_numbers<[1], [0], [0], [1], [0, 0, 1, 1], [], []>} : vector<8x128xbf16>, vector<128x384xbf16>, vector<8x384xf32> -> vector<8x384xf32>
    %188 = vector.extract_strided_slice %184 {offsets = [0, 0], sizes = [8, 128], strides = [1, 1]} : vector<8x384xf32> to vector<8x128xf32>
    %189 = vector.extract_strided_slice %184 {offsets = [0, 128], sizes = [8, 128], strides = [1, 1]} : vector<8x384xf32> to vector<8x128xf32>
    %190 = vector.extract_strided_slice %184 {offsets = [0, 256], sizes = [8, 128], strides = [1, 1]} : vector<8x384xf32> to vector<8x128xf32>
    %191 = vector.extract_strided_slice %187 {offsets = [0, 0], sizes = [8, 128], strides = [1, 1]} : vector<8x384xf32> to vector<8x128xf32>
    %192 = vector.extract_strided_slice %187 {offsets = [0, 128], sizes = [8, 128], strides = [1, 1]} : vector<8x384xf32> to vector<8x128xf32>
    %193 = vector.extract_strided_slice %187 {offsets = [0, 256], sizes = [8, 128], strides = [1, 1]} : vector<8x384xf32> to vector<8x128xf32>
    %194 = arith.addf %188, %191 : vector<8x128xf32>
    %195 = arith.negf %194 : vector<8x128xf32>
    %196 = math.exp %195 : vector<8x128xf32>
    %cst_54 = arith.constant 1.000000e+00 : f32
    %197 = vector.broadcast %cst_54 : f32 to vector<8x128xf32>
    %198 = arith.addf %197, %196 : vector<8x128xf32>
    %199 = arith.divf %197, %198 : vector<8x128xf32>
    %200 = arith.addf %189, %192 : vector<8x128xf32>
    %201 = arith.negf %200 : vector<8x128xf32>
    %202 = math.exp %201 : vector<8x128xf32>
    %cst_55 = arith.constant 1.000000e+00 : f32
    %203 = vector.broadcast %cst_55 : f32 to vector<8x128xf32>
    %204 = arith.addf %203, %202 : vector<8x128xf32>
    %205 = arith.divf %203, %204 : vector<8x128xf32>
    %206 = arith.addf %193, %15 : vector<8x128xf32>
    %207 = arith.mulf %199, %206 : vector<8x128xf32>
    %208 = arith.addf %190, %207 : vector<8x128xf32>
    %209 = math.tanh %208 : vector<8x128xf32>
    %cst_56 = arith.constant 1.000000e+00 : f32
    %210 = vector.broadcast %cst_56 : f32 to vector<8x128xf32>
    %211 = arith.subf %210, %205 : vector<8x128xf32>
    %212 = arith.mulf %211, %209 : vector<8x128xf32>
    %213 = arith.mulf %205, %181 : vector<8x128xf32>
    %214 = arith.addf %212, %213 : vector<8x128xf32>
    %c6_i32 = arith.constant 6 : i32
    %c8_i32_57 = arith.constant 8 : i32
    %215 = arith.muli %c6_i32, %c8_i32_57 : i32
    %216 = arith.index_cast %215 : i32 to index
    %c0_58 = arith.constant 0 : index
    %217 = vector.load %arg12[%216, %c0_58] : memref<64x384xf32, #tpu.memory_space<vmem>>, vector<8x384xf32>
    %218 = arith.truncf %214 : vector<8x128xf32> to vector<8x128xbf16>
    %c0_59 = arith.constant 0 : index
    %c0_60 = arith.constant 0 : index
    %219 = vector.load %arg2[%c0_59, %c0_60] : memref<128x384xbf16, #tpu.memory_space<vmem>>, vector<128x384xbf16>
    %cst_61 = arith.constant dense<0.000000e+00> : vector<8x384xf32>
    %220 = tpu.matmul %218, %219, %cst_61 {dimension_numbers = #tpu.dot_dimension_numbers<[1], [0], [0], [1], [0, 0, 1, 1], [], []>} : vector<8x128xbf16>, vector<128x384xbf16>, vector<8x384xf32> -> vector<8x384xf32>
    %221 = vector.extract_strided_slice %217 {offsets = [0, 0], sizes = [8, 128], strides = [1, 1]} : vector<8x384xf32> to vector<8x128xf32>
    %222 = vector.extract_strided_slice %217 {offsets = [0, 128], sizes = [8, 128], strides = [1, 1]} : vector<8x384xf32> to vector<8x128xf32>
    %223 = vector.extract_strided_slice %217 {offsets = [0, 256], sizes = [8, 128], strides = [1, 1]} : vector<8x384xf32> to vector<8x128xf32>
    %224 = vector.extract_strided_slice %220 {offsets = [0, 0], sizes = [8, 128], strides = [1, 1]} : vector<8x384xf32> to vector<8x128xf32>
    %225 = vector.extract_strided_slice %220 {offsets = [0, 128], sizes = [8, 128], strides = [1, 1]} : vector<8x384xf32> to vector<8x128xf32>
    %226 = vector.extract_strided_slice %220 {offsets = [0, 256], sizes = [8, 128], strides = [1, 1]} : vector<8x384xf32> to vector<8x128xf32>
    %227 = arith.addf %221, %224 : vector<8x128xf32>
    %228 = arith.negf %227 : vector<8x128xf32>
    %229 = math.exp %228 : vector<8x128xf32>
    %cst_62 = arith.constant 1.000000e+00 : f32
    %230 = vector.broadcast %cst_62 : f32 to vector<8x128xf32>
    %231 = arith.addf %230, %229 : vector<8x128xf32>
    %232 = arith.divf %230, %231 : vector<8x128xf32>
    %233 = arith.addf %222, %225 : vector<8x128xf32>
    %234 = arith.negf %233 : vector<8x128xf32>
    %235 = math.exp %234 : vector<8x128xf32>
    %cst_63 = arith.constant 1.000000e+00 : f32
    %236 = vector.broadcast %cst_63 : f32 to vector<8x128xf32>
    %237 = arith.addf %236, %235 : vector<8x128xf32>
    %238 = arith.divf %236, %237 : vector<8x128xf32>
    %239 = arith.addf %226, %15 : vector<8x128xf32>
    %240 = arith.mulf %232, %239 : vector<8x128xf32>
    %241 = arith.addf %223, %240 : vector<8x128xf32>
    %242 = math.tanh %241 : vector<8x128xf32>
    %cst_64 = arith.constant 1.000000e+00 : f32
    %243 = vector.broadcast %cst_64 : f32 to vector<8x128xf32>
    %244 = arith.subf %243, %238 : vector<8x128xf32>
    %245 = arith.mulf %244, %242 : vector<8x128xf32>
    %246 = arith.mulf %238, %214 : vector<8x128xf32>
    %247 = arith.addf %245, %246 : vector<8x128xf32>
    %c7_i32 = arith.constant 7 : i32
    %c8_i32_65 = arith.constant 8 : i32
    %248 = arith.muli %c7_i32, %c8_i32_65 : i32
    %249 = arith.index_cast %248 : i32 to index
    %c0_66 = arith.constant 0 : index
    %250 = vector.load %arg12[%249, %c0_66] : memref<64x384xf32, #tpu.memory_space<vmem>>, vector<8x384xf32>
    %251 = arith.truncf %247 : vector<8x128xf32> to vector<8x128xbf16>
    %c0_67 = arith.constant 0 : index
    %c0_68 = arith.constant 0 : index
    %252 = vector.load %arg2[%c0_67, %c0_68] : memref<128x384xbf16, #tpu.memory_space<vmem>>, vector<128x384xbf16>
    %cst_69 = arith.constant dense<0.000000e+00> : vector<8x384xf32>
    %253 = tpu.matmul %251, %252, %cst_69 {dimension_numbers = #tpu.dot_dimension_numbers<[1], [0], [0], [1], [0, 0, 1, 1], [], []>} : vector<8x128xbf16>, vector<128x384xbf16>, vector<8x384xf32> -> vector<8x384xf32>
    %254 = vector.extract_strided_slice %250 {offsets = [0, 0], sizes = [8, 128], strides = [1, 1]} : vector<8x384xf32> to vector<8x128xf32>
    %255 = vector.extract_strided_slice %250 {offsets = [0, 128], sizes = [8, 128], strides = [1, 1]} : vector<8x384xf32> to vector<8x128xf32>
    %256 = vector.extract_strided_slice %250 {offsets = [0, 256], sizes = [8, 128], strides = [1, 1]} : vector<8x384xf32> to vector<8x128xf32>
    %257 = vector.extract_strided_slice %253 {offsets = [0, 0], sizes = [8, 128], strides = [1, 1]} : vector<8x384xf32> to vector<8x128xf32>
    %258 = vector.extract_strided_slice %253 {offsets = [0, 128], sizes = [8, 128], strides = [1, 1]} : vector<8x384xf32> to vector<8x128xf32>
    %259 = vector.extract_strided_slice %253 {offsets = [0, 256], sizes = [8, 128], strides = [1, 1]} : vector<8x384xf32> to vector<8x128xf32>
    %260 = arith.addf %254, %257 : vector<8x128xf32>
    %261 = arith.negf %260 : vector<8x128xf32>
    %262 = math.exp %261 : vector<8x128xf32>
    %cst_70 = arith.constant 1.000000e+00 : f32
    %263 = vector.broadcast %cst_70 : f32 to vector<8x128xf32>
    %264 = arith.addf %263, %262 : vector<8x128xf32>
    %265 = arith.divf %263, %264 : vector<8x128xf32>
    %266 = arith.addf %255, %258 : vector<8x128xf32>
    %267 = arith.negf %266 : vector<8x128xf32>
    %268 = math.exp %267 : vector<8x128xf32>
    %cst_71 = arith.constant 1.000000e+00 : f32
    %269 = vector.broadcast %cst_71 : f32 to vector<8x128xf32>
    %270 = arith.addf %269, %268 : vector<8x128xf32>
    %271 = arith.divf %269, %270 : vector<8x128xf32>
    %272 = arith.addf %259, %15 : vector<8x128xf32>
    %273 = arith.mulf %265, %272 : vector<8x128xf32>
    %274 = arith.addf %256, %273 : vector<8x128xf32>
    %275 = math.tanh %274 : vector<8x128xf32>
    %cst_72 = arith.constant 1.000000e+00 : f32
    %276 = vector.broadcast %cst_72 : f32 to vector<8x128xf32>
    %277 = arith.subf %276, %271 : vector<8x128xf32>
    %278 = arith.mulf %277, %275 : vector<8x128xf32>
    %279 = arith.mulf %271, %247 : vector<8x128xf32>
    %280 = arith.addf %278, %279 : vector<8x128xf32>
    %c8_i32_73 = arith.constant 8 : i32
    %c0_74 = arith.constant 0 : index
    %c0_75 = arith.constant 0 : index
    %281 = vector.load %arg5[%c0_74, %c0_75] : memref<8x6xf32, #tpu.memory_space<vmem>>, vector<8x6xf32>
    %282 = vector.extract_strided_slice %281 {offsets = [0, 0], sizes = [8, 1], strides = [1, 1]} : vector<8x6xf32> to vector<8x1xf32>
    %cst_76 = arith.constant 1.000000e+00 : f32
    %283 = vector.broadcast %cst_76 : f32 to vector<8x1xf32>
    %284 = arith.cmpf oeq, %282, %283 : vector<8x1xf32>
    %285 = arith.extui %284 : vector<8x1xi1> to vector<8x1xi32>
    %286 = arith.sitofp %285 : vector<8x1xi32> to vector<8x1xf32>
    %287 = vector.extract_strided_slice %281 {offsets = [0, 5], sizes = [8, 1], strides = [1, 1]} : vector<8x6xf32> to vector<8x1xf32>
    %cst_77 = arith.constant 1.000000e+00 : f32
    %288 = vector.broadcast %cst_77 : f32 to vector<8x1xf32>
    %289 = arith.cmpf oeq, %287, %288 : vector<8x1xf32>
    %290 = arith.extui %289 : vector<8x1xi1> to vector<8x1xi32>
    %291 = arith.sitofp %290 : vector<8x1xi32> to vector<8x1xf32>
    %cst_78 = arith.constant 1.000000e+00 : f32
    %292 = vector.broadcast %cst_78 : f32 to vector<8x1xf32>
    %293 = arith.subf %292, %286 : vector<8x1xf32>
    %294 = arith.mulf %291, %293 : vector<8x1xf32>
    %295 = vector.extract_strided_slice %280 {offsets = [0, 0], sizes = [8, 64], strides = [1, 1]} : vector<8x128xf32> to vector<8x64xf32>
    %296 = vector.broadcast %286 : vector<8x1xf32> to vector<8x64xf32>
    %297 = arith.mulf %295, %296 : vector<8x64xf32>
    %298 = vector.extract_strided_slice %280 {offsets = [0, 64], sizes = [8, 64], strides = [1, 1]} : vector<8x128xf32> to vector<8x64xf32>
    %299 = vector.broadcast %294 : vector<8x1xf32> to vector<8x64xf32>
    %300 = arith.mulf %298, %299 : vector<8x64xf32>
    %301 = arith.addf %297, %300 : vector<8x64xf32>
    %302 = arith.truncf %301 : vector<8x64xf32> to vector<8x64xbf16>
    %c0_79 = arith.constant 0 : index
    %c0_80 = arith.constant 0 : index
    %303 = vector.load %arg6[%c0_79, %c0_80] : memref<64x128xbf16, #tpu.memory_space<vmem>>, vector<64x128xbf16>
    %cst_81 = arith.constant dense<0.000000e+00> : vector<8x128xf32>
    %304 = tpu.matmul %302, %303, %cst_81 {dimension_numbers = #tpu.dot_dimension_numbers<[1], [0], [0], [1], [0, 0, 1, 1], [], []>} : vector<8x64xbf16>, vector<64x128xbf16>, vector<8x128xf32> -> vector<8x128xf32>
    %305 = arith.truncf %281 : vector<8x6xf32> to vector<8x6xbf16>
    %c0_82 = arith.constant 0 : index
    %c0_83 = arith.constant 0 : index
    %306 = vector.load %arg7[%c0_82, %c0_83] : memref<6x128xbf16, #tpu.memory_space<vmem>>, vector<6x128xbf16>
    %cst_84 = arith.constant dense<0.000000e+00> : vector<8x128xf32>
    %307 = tpu.matmul %305, %306, %cst_84 {dimension_numbers = #tpu.dot_dimension_numbers<[1], [0], [0], [1], [0, 0, 1, 1], [], []>} : vector<8x6xbf16>, vector<6x128xbf16>, vector<8x128xf32> -> vector<8x128xf32>
    %308 = arith.addf %304, %307 : vector<8x128xf32>
    %c0_85 = arith.constant 0 : index
    %c0_86 = arith.constant 0 : index
    %309 = vector.load %arg8[%c0_85, %c0_86] : memref<1x128xf32, #tpu.memory_space<vmem>>, vector<1x128xf32>
    %310 = vector.broadcast %309 : vector<1x128xf32> to vector<8x128xf32>
    %311 = arith.addf %308, %310 : vector<8x128xf32>
    %cst_87 = arith.constant 0.000000e+00 : f32
    %312 = vector.broadcast %cst_87 : f32 to vector<8x128xf32>
    %313 = arith.maximumf %311, %312 : vector<8x128xf32>
    %314 = arith.truncf %313 : vector<8x128xf32> to vector<8x128xbf16>
    %c0_88 = arith.constant 0 : index
    %c0_89 = arith.constant 0 : index
    %315 = vector.load %arg9[%c0_88, %c0_89] : memref<128x128xbf16, #tpu.memory_space<vmem>>, vector<128x128xbf16>
    %cst_90 = arith.constant dense<0.000000e+00> : vector<8x128xf32>
    %316 = tpu.matmul %314, %315, %cst_90 {dimension_numbers = #tpu.dot_dimension_numbers<[1], [0], [0], [1], [0, 0, 1, 1], [], []>} : vector<8x128xbf16>, vector<128x128xbf16>, vector<8x128xf32> -> vector<8x128xf32>
    %c0_91 = arith.constant 0 : index
    %c0_92 = arith.constant 0 : index
    %317 = vector.load %arg10[%c0_91, %c0_92] : memref<1x128xf32, #tpu.memory_space<vmem>>, vector<1x128xf32>
    %318 = vector.broadcast %317 : vector<1x128xf32> to vector<8x128xf32>
    %319 = arith.addf %316, %318 : vector<8x128xf32>
    %c0_93 = arith.constant 0 : index
    %c0_94 = arith.constant 0 : index
    %320 = vector.load %arg11[%c0_93, %c0_94] : memref<8x128xf32, #tpu.memory_space<vmem>>, vector<8x128xf32>
    tpu.vector_store %arg11[%c0_93, %c0_94], %319 {strides = array<i32>} : memref<8x128xf32, #tpu.memory_space<vmem>>, vector<8x128xf32>,
    return
  }
}

</mosaic_0001>

<llo_original>
// kernel: _forward.1
$region0: #{_forward.1}
  #allocation0 [shape = 'u32[]', space=smem, size = 0x4, offset = 0x4, fixed_abs, tag = 'smem constant byte address 0x4 - core index']
  #allocation1 [shape = 'u32[144,128]{1,0:T(1,128)}', space=vmem, size = 0x12000, scoped, tag = 'internal scratch']
  #allocation2 [shape = 'f32[64,384]{1,0:T(8,128)}', space=vmem, size = 0x18000, scoped, tag = 'scratch operand']
  %s0 = inlined_call_operand.vmem [shape: s32[64,1], index: 0, kind: input, shape index: {}]
  %s1 = inlined_call_operand.vmem [shape: bf16[16,384], index: 1, kind: input, shape index: {}]
  %s2 = inlined_call_operand.vmem [shape: bf16[128,384], index: 2, kind: input, shape index: {}]
  %s3 = inlined_call_operand.vmem [shape: f32[1,384], index: 3, kind: input, shape index: {}]
  %s4 = inlined_call_operand.vmem [shape: f32[1,128], index: 4, kind: input, shape index: {}]
  %s5 = inlined_call_operand.vmem [shape: f32[8,6], index: 5, kind: input, shape index: {}]
  %s6 = inlined_call_operand.vmem [shape: bf16[64,128], index: 6, kind: input, shape index: {}]
  %s7 = inlined_call_operand.vmem [shape: bf16[6,128], index: 7, kind: input, shape index: {}]
  %s8 = inlined_call_operand.vmem [shape: f32[1,128], index: 8, kind: input, shape index: {}, may-alias: {8,10}]
  %s9 = inlined_call_operand.vmem [shape: bf16[128,128], index: 9, kind: input, shape index: {}]
  %s10 = inlined_call_operand.vmem [shape: f32[1,128], index: 10, kind: input, shape index: {}, may-alias: {8,10}]
  %s11 = inlined_call_operand.vmem [shape: f32[8,128], index: 11, kind: output, shape index: {}]
  %s12 = sld [smem:[#allocation0]]
  $region54: #{_forward.1} parent=0
    _
  %s14 = ssub.s32 1, %s12
  %s15 = scalar_select 0, %s14, %s12
  // Predicated region
  $region2: #{_forward.1} parent=0 // pred_check
    _
  $region3: #{_forward.1} parent=0 // pred_check_branch
    %17 = sbr.rel (0) target = $region5
  $region4: #{_forward.1} parent=0 // pred_region
    _
  $region5: #{_forward.1} parent=0 // pred_fallthru
    _
  // Predicated region
  $region6: #{_forward.1} parent=0 // pred_check
    _
  $region7: #{_forward.1} parent=0 // pred_check_branch
    %19 = sbr.rel (0) target = $region9
  $region8: #{_forward.1} parent=0 // pred_region
    _
  $region9: #{_forward.1} parent=0 // pred_fallthru
    _
  // Predicated region
  $region10: #{_forward.1} parent=0 // pred_check
    _
  $region11: #{_forward.1} parent=0 // pred_check_branch
    %21 = sbr.rel (0) target = $region13
  $region12: #{_forward.1} parent=0 // pred_region
    _
  $region13: #{_forward.1} parent=0 // pred_fallthru
    _
  // Predicated region
  $region14: #{_forward.1} parent=0 // pred_check
    _
  $region15: #{_forward.1} parent=0 // pred_check_branch
    %23 = sbr.rel (0) target = $region17
  $region16: #{_forward.1} parent=0 // pred_region
    _
  $region17: #{_forward.1} parent=0 // pred_fallthru
    _
  // Predicated region
  $region18: #{_forward.1} parent=0 // pred_check
    _
  $region19: #{_forward.1} parent=0 // pred_check_branch
    %25 = sbr.rel (0) target = $region21
  $region20: #{_forward.1} parent=0 // pred_region
    _
  $region21: #{_forward.1} parent=0 // pred_fallthru
    _
  // Predicated region
  $region22: #{_forward.1} parent=0 // pred_check
    _
  $region23: #{_forward.1} parent=0 // pred_check_branch
    %27 = sbr.rel (0) target = $region25
  $region24: #{_forward.1} parent=0 // pred_region
    _
  $region25: #{_forward.1} parent=0 // pred_fallthru
    _
  // Predicated region
  $region26: #{_forward.1} parent=0 // pred_check
    _
  $region27: #{_forward.1} parent=0 // pred_check_branch
    %29 = sbr.rel (0) target = $region29
  $region28: #{_forward.1} parent=0 // pred_region
    _
  $region29: #{_forward.1} parent=0 // pred_fallthru
    _
  // Predicated region
  $region30: #{_forward.1} parent=0 // pred_check
    _
  $region31: #{_forward.1} parent=0 // pred_check_branch
    %31 = sbr.rel (0) target = $region33
  $region32: #{_forward.1} parent=0 // pred_region
    _
  $region33: #{_forward.1} parent=0 // pred_fallthru
    _
  // Predicated region
  $region34: #{_forward.1} parent=0 // pred_check
    _
  $region35: #{_forward.1} parent=0 // pred_check_branch
    %33 = sbr.rel (0) target = $region37
  $region36: #{_forward.1} parent=0 // pred_region
    _
  $region37: #{_forward.1} parent=0 // pred_fallthru
    _
  // Predicated region
  $region38: #{_forward.1} parent=0 // pred_check
    _
  $region39: #{_forward.1} parent=0 // pred_check_branch
    %35 = sbr.rel (0) target = $region41
  $region40: #{_forward.1} parent=0 // pred_region
    _
  $region41: #{_forward.1} parent=0 // pred_fallthru
    _
  // Predicated region
  $region42: #{_forward.1} parent=0 // pred_check
    _
  $region43: #{_forward.1} parent=0 // pred_check_branch
    %37 = sbr.rel (0) target = $region45
  $region44: #{_forward.1} parent=0 // pred_region
    _
  $region45: #{_forward.1} parent=0 // pred_fallthru
    _
  %v39 = vld [vmem:[%s0] sm:$0xff]
  %v40 = vld [vmem:[%s0 + $0x8] sm:$0xff]
  %v41 = vld [vmem:[%s0 + $0x10] sm:$0xff]
  %v42 = vld [vmem:[%s0 + $0x18] sm:$0xff]
  %v43 = vld [vmem:[%s0 + $0x20] sm:$0xff]
  %v44 = vld [vmem:[%s0 + $0x28] sm:$0xff]
  %v45 = vld [vmem:[%s0 + $0x30] sm:$0xff]
  %v46 = vld [vmem:[%s0 + $0x38] sm:$0xff]
  %v47 = vlaneseq
  %v48 = vand.u32 %v47, 127
  %49 = vset.pattern.permute.xlu0 0
  %50 = vperm.xlu0 %49, %v39
  %v51 = vpop.permute.xlu0 %50
  %52 = vset.pattern.permute.xlu0 0
  %53 = vperm.xlu0 %52, %v40
  %v54 = vpop.permute.xlu0 %53
  %55 = vset.pattern.permute.xlu0 0
  %56 = vperm.xlu0 %55, %v41
  %v57 = vpop.permute.xlu0 %56
  %58 = vset.pattern.permute.xlu0 0
  %59 = vperm.xlu0 %58, %v42
  %v60 = vpop.permute.xlu0 %59
  %61 = vset.pattern.permute.xlu0 0
  %62 = vperm.xlu0 %61, %v43
  %v63 = vpop.permute.xlu0 %62
  %64 = vset.pattern.permute.xlu0 0
  %65 = vperm.xlu0 %64, %v44
  %v66 = vpop.permute.xlu0 %65
  %67 = vset.pattern.permute.xlu0 0
  %68 = vperm.xlu0 %67, %v45
  %v69 = vpop.permute.xlu0 %68
  %70 = vset.pattern.permute.xlu0 0
  %71 = vperm.xlu0 %70, %v46
  %v72 = vpop.permute.xlu0 %71
  %vm73 = vcmp.eq.s32.totalorder %v51, %v48
  %vm74 = vcmp.eq.s32.totalorder %v54, %v48
  %vm75 = vcmp.eq.s32.totalorder %v57, %v48
  %vm76 = vcmp.eq.s32.totalorder %v60, %v48
  %vm77 = vcmp.eq.s32.totalorder %v63, %v48
  %vm78 = vcmp.eq.s32.totalorder %v66, %v48
  %vm79 = vcmp.eq.s32.totalorder %v69, %v48
  %vm80 = vcmp.eq.s32.totalorder %v72, %v48
  %v81 = vsel %vm73, 1, 0
  %v82 = vsel %vm74, 1, 0
  %v83 = vsel %vm75, 1, 0
  %v84 = vsel %vm76, 1, 0
  %v85 = vsel %vm77, 1, 0
  %v86 = vsel %vm78, 1, 0
  %v87 = vsel %vm79, 1, 0
  %v88 = vsel %vm80, 1, 0
  %v89 = vcvt.s32.f32 %v81
  %v90 = vcvt.s32.f32 %v82
  %v91 = vcvt.s32.f32 %v83
  %v92 = vcvt.s32.f32 %v84
  %v93 = vcvt.s32.f32 %v85
  %v94 = vcvt.s32.f32 %v86
  %v95 = vcvt.s32.f32 %v87
  %v96 = vcvt.s32.f32 %v88
  %v97 = vpack.c.bf16 %v90, %v89
  %v98 = vpack.c.bf16 %v92, %v91
  %v99 = vpack.c.bf16 %v94, %v93
  %v100 = vpack.c.bf16 %v96, %v95
  %v101 = vld [vmem:[%s1] sm:$0xff]
  %v102 = vld [vmem:[%s1 + $0x8] sm:$0xf]
  %v103 = vld [vmem:[%s1 + $0xc] sm:$0xff]
  %v104 = vld [vmem:[%s1 + $0x14] sm:$0xf]
  %v105 = vld [vmem:[%s3] sm:$0x7]
  %v107 = vlaneseq
  %v108 = vshrl.u32 %v107, 7
  %v109 = vsub.s32 0, %v108
  %v110 = vrot.slane %v105, %v109
  %v111 = vlaneseq
  %v112 = vshrl.u32 %v111, 7
  %v113 = vsub.s32 1, %v112
  %v114 = vrot.slane %v105, %v113
  %v115 = vlaneseq
  %v116 = vshrl.u32 %v115, 7
  %v117 = vsub.s32 2, %v116
  %v118 = vrot.slane %v105, %v117
  %v126 = vunpack.c.l.b16 %v101
  %v127 = vunpack.c.h.b16 %v101
  %v128 = vunpack.c.l.b16 %v102
  %v129 = vunpack.c.l.b16 %v103
  %v130 = vunpack.c.h.b16 %v103
  %v131 = vunpack.c.l.b16 %v104
  %v132 = vpack.c.b16 %v129, %v126
  %v133 = vpack.c.b16 %v130, %v127
  %v134 = vpack.c.b16 %v131, %v128
  %vm138 = vcmask 130048
  %v140 = vsel %vm138, %v97, 0
  %v143 = vsel %vm138, %v98, 0
  %v146 = vsel %vm138, %v99, 0
  %v149 = vsel %vm138, %v100, 0
  %151 = vmatprep.subr.bf16.mxu0 %v133
  %152 = vmatpush1.bf16.msra.mxu0 %v132
  %153 = vmatprep.subr.bf16.mxu0 0
  %154 = vmatpush1.bf16.msra.mxu0 0
  %155 = vmatprep.subr.bf16.mxu0 0
  %156 = vmatpush1.bf16.msra.mxu0 0
  %157 = vmatprep.subr.bf16.mxu0 0
  %158 = vmatpush1.bf16.msra.mxu0 0
  %159 = vmatprep.subr.bf16.mxu0 0
  %160 = vmatpush1.bf16.msra.mxu0 0
  %161 = vmatprep.subr.bf16.mxu0 0
  %162 = vmatpush1.bf16.msra.mxu0 0
  %163 = vmatprep.subr.bf16.mxu0 0
  %164 = vmatpush1.bf16.msra.mxu0 0
  %165 = vmatprep.subr.bf16.mxu0 0
  %166 = vmatpush1.bf16.msra.mxu0 0
  %167 = vmatprep.subr.bf16.mxu0 0
  %168 = vmatpush1.bf16.msra.mxu0 0
  %169 = vmatprep.subr.bf16.mxu0 0
  %170 = vmatpush1.bf16.msra.mxu0 0
  %171 = vmatprep.subr.bf16.mxu0 0
  %172 = vmatpush1.bf16.msra.mxu0 0
  %173 = vmatprep.subr.bf16.mxu0 0
  %174 = vmatpush1.bf16.msra.mxu0 0
  %175 = vmatprep.subr.bf16.mxu0 0
  %176 = vmatpush1.bf16.msra.mxu0 0
  %177 = vmatprep.subr.bf16.mxu0 0
  %178 = vmatpush1.bf16.msra.mxu0 0
  %179 = vmatprep.subr.bf16.mxu0 0
  %180 = vmatpush1.bf16.msra.mxu0 0
  %181 = vmatprep.subr.bf16.mxu0 0
  %182 = vmatpush1.bf16.msra.mxu0 0
  %183 = vmatprep.mubr.bf16.mxu0 0
  %184 = vmatmul.mubr.bf16.gmra.mrb[0].mxu0 %v140
  %v185 = vpop.f32.mrb[0].mxu0
  %v186 = vadd.f32 %v110, %v185
  %v187 = vpop.f32.mrb[0].mxu0
  %v188 = vadd.f32 %v114, %v187
  %v189 = vpop.f32.mrb[0].mxu0
  %v190 = vadd.f32 %v110, %v189
  %v191 = vpop.f32.mrb[0].mxu0
  %v192 = vadd.f32 %v114, %v191
  %193 = vmatprep.mubr.bf16.mxu0 0
  %194 = vmatmul.mubr.bf16.gmra.mrb[0].mxu0 %v143
  %v195 = vpop.f32.mrb[0].mxu0
  %v196 = vadd.f32 %v110, %v195
  %v197 = vpop.f32.mrb[0].mxu0
  %v198 = vadd.f32 %v114, %v197
  %v199 = vpop.f32.mrb[0].mxu0
  %v200 = vadd.f32 %v110, %v199
  %v201 = vpop.f32.mrb[0].mxu0
  %v202 = vadd.f32 %v114, %v201
  %203 = vmatprep.mubr.bf16.mxu0 0
  %204 = vmatmul.mubr.bf16.gmra.mrb[0].mxu0 %v146
  %v205 = vpop.f32.mrb[0].mxu0
  %v206 = vadd.f32 %v110, %v205
  %v207 = vpop.f32.mrb[0].mxu0
  %v208 = vadd.f32 %v114, %v207
  %v209 = vpop.f32.mrb[0].mxu0
  %v210 = vadd.f32 %v110, %v209
  %v211 = vpop.f32.mrb[0].mxu0
  %v212 = vadd.f32 %v114, %v211
  %213 = vmatprep.mubr.bf16.mxu0 0
  %214 = vmatmul.mubr.bf16.gmra.mrb[0].mxu0 %v149
  %v215 = vpop.f32.mrb[0].mxu0
  %v216 = vadd.f32 %v110, %v215
  %v217 = vpop.f32.mrb[0].mxu0
  %v218 = vadd.f32 %v114, %v217
  %v219 = vpop.f32.mrb[0].mxu0
  %v220 = vadd.f32 %v110, %v219
  %v221 = vpop.f32.mrb[0].mxu0
  %v222 = vadd.f32 %v114, %v221
  %223 = vdwg.mxu0
  %224 = vmatprep.subr.bf16.mxu0 0
  %225 = vmatpush1.bf16.msra.mxu0 %v134
  %226 = vmatprep.subr.bf16.mxu0 0
  %227 = vmatpush1.bf16.msra.mxu0 0
  %228 = vmatprep.subr.bf16.mxu0 0
  %229 = vmatpush1.bf16.msra.mxu0 0
  %230 = vmatprep.subr.bf16.mxu0 0
  %231 = vmatpush1.bf16.msra.mxu0 0
  %232 = vmatprep.subr.bf16.mxu0 0
  %233 = vmatpush1.bf16.msra.mxu0 0
  %234 = vmatprep.subr.bf16.mxu0 0
  %235 = vmatpush1.bf16.msra.mxu0 0
  %236 = vmatprep.subr.bf16.mxu0 0
  %237 = vmatpush1.bf16.msra.mxu0 0
  %238 = vmatprep.subr.bf16.mxu0 0
  %239 = vmatpush1.bf16.msra.mxu0 0
  %240 = vmatprep.subr.bf16.mxu0 0
  %241 = vmatpush1.bf16.msra.mxu0 0
  %242 = vmatprep.subr.bf16.mxu0 0
  %243 = vmatpush1.bf16.msra.mxu0 0
  %244 = vmatprep.subr.bf16.mxu0 0
  %245 = vmatpush1.bf16.msra.mxu0 0
  %246 = vmatprep.subr.bf16.mxu0 0
  %247 = vmatpush1.bf16.msra.mxu0 0
  %248 = vmatprep.subr.bf16.mxu0 0
  %249 = vmatpush1.bf16.msra.mxu0 0
  %250 = vmatprep.subr.bf16.mxu0 0
  %251 = vmatpush1.bf16.msra.mxu0 0
  %252 = vmatprep.subr.bf16.mxu0 0
  %253 = vmatpush1.bf16.msra.mxu0 0
  %254 = vmatprep.subr.bf16.mxu0 0
  %255 = vmatpush1.bf16.msra.mxu0 0
  %256 = vmatprep.mubr.bf16.mxu0 0
  %257 = vmatmul.mubr.bf16.gmra.mrb[0].mxu0 %v140
  %v258 = vpop.f32.mrb[0].mxu0
  %v259 = vadd.f32 %v118, %v258
  %v260 = vpop.f32.mrb[0].mxu0
  %v261 = vpop.f32.mrb[0].mxu0
  %v262 = vadd.f32 %v118, %v261
  %v263 = vpop.f32.mrb[0].mxu0
  %264 = vmatprep.mubr.bf16.mxu0 0
  %265 = vmatmul.mubr.bf16.gmra.mrb[0].mxu0 %v143
  %v266 = vpop.f32.mrb[0].mxu0
  %v267 = vadd.f32 %v118, %v266
  %v268 = vpop.f32.mrb[0].mxu0
  %v269 = vpop.f32.mrb[0].mxu0
  %v270 = vadd.f32 %v118, %v269
  %v271 = vpop.f32.mrb[0].mxu0
  %272 = vmatprep.mubr.bf16.mxu0 0
  %273 = vmatmul.mubr.bf16.gmra.mrb[0].mxu0 %v146
  %v274 = vpop.f32.mrb[0].mxu0
  %v275 = vadd.f32 %v118, %v274
  %v276 = vpop.f32.mrb[0].mxu0
  %v277 = vpop.f32.mrb[0].mxu0
  %v278 = vadd.f32 %v118, %v277
  %v279 = vpop.f32.mrb[0].mxu0
  %280 = vmatprep.mubr.bf16.mxu0 0
  %281 = vmatmul.mubr.bf16.gmra.mrb[0].mxu0 %v149
  %v282 = vpop.f32.mrb[0].mxu0
  %v283 = vadd.f32 %v118, %v282
  %v284 = vpop.f32.mrb[0].mxu0
  %v285 = vpop.f32.mrb[0].mxu0
  %v286 = vadd.f32 %v118, %v285
  %v287 = vpop.f32.mrb[0].mxu0
  %288 = vdwg.mxu0
  %289 = vst [vmem:[#allocation2] sm:$0xff] %v186
  %290 = vst [vmem:[#allocation2 + $0x8] sm:$0xff] %v188
  %291 = vst [vmem:[#allocation2 + $0x10] sm:$0xff] %v259
  %292 = vst [vmem:[#allocation2 + $0x18] sm:$0xff] %v190
  %293 = vst [vmem:[#allocation2 + $0x20] sm:$0xff] %v192
  %294 = vst [vmem:[#allocation2 + $0x28] sm:$0xff] %v262
  %295 = vst [vmem:[#allocation2 + $0x30] sm:$0xff] %v196
  %296 = vst [vmem:[#allocation2 + $0x38] sm:$0xff] %v198
  %297 = vst [vmem:[#allocation2 + $0x40] sm:$0xff] %v267
  %298 = vst [vmem:[#allocation2 + $0x48] sm:$0xff] %v200
  %299 = vst [vmem:[#allocation2 + $0x50] sm:$0xff] %v202
  %300 = vst [vmem:[#allocation2 + $0x58] sm:$0xff] %v270
  %301 = vst [vmem:[#allocation2 + $0x60] sm:$0xff] %v206
  %302 = vst [vmem:[#allocation2 + $0x68] sm:$0xff] %v208
  %303 = vst [vmem:[#allocation2 + $0x70] sm:$0xff] %v275
  %304 = vst [vmem:[#allocation2 + $0x78] sm:$0xff] %v210
  %305 = vst [vmem:[#allocation2 + $0x80] sm:$0xff] %v212
  %306 = vst [vmem:[#allocation2 + $0x88] sm:$0xff] %v278
  %307 = vst [vmem:[#allocation2 + $0x90] sm:$0xff] %v216
  %308 = vst [vmem:[#allocation2 + $0x98] sm:$0xff] %v218
  %309 = vst [vmem:[#allocation2 + $0xa0] sm:$0xff] %v283
  %310 = vst [vmem:[#allocation2 + $0xa8] sm:$0xff] %v220
  %311 = vst [vmem:[#allocation2 + $0xb0] sm:$0xff] %v222
  %312 = vst [vmem:[#allocation2 + $0xb8] sm:$0xff] %v286
  %v313 = vld [vmem:[%s4] sm:$0x1]
  %v315 = vlaneseq
  %v316 = vshrl.u32 %v315, 7
  %v317 = vsub.s32 0, %v316
  %v318 = vrot.slane %v313, %v317
  %v320 = vld [vmem:[#allocation2] sm:$0xff]
  %v321 = vld [vmem:[#allocation2 + $0x8] sm:$0xff]
  %v322 = vld [vmem:[#allocation2 + $0x10] sm:$0xff]
  %v323 = vld [vmem:[%s2] sm:$0xff]
  %v324 = vld [vmem:[%s2 + $0x8] sm:$0xf]
  %v325 = vld [vmem:[%s2 + $0xc] sm:$0xff]
  %v326 = vld [vmem:[%s2 + $0x14] sm:$0xf]
  %v327 = vld [vmem:[%s2 + $0x18] sm:$0xff]
  %v328 = vld [vmem:[%s2 + $0x20] sm:$0xf]
  %v329 = vld [vmem:[%s2 + $0x24] sm:$0xff]
  %v330 = vld [vmem:[%s2 + $0x2c] sm:$0xf]
  %v331 = vld [vmem:[%s2 + $0x30] sm:$0xff]
  %v332 = vld [vmem:[%s2 + $0x38] sm:$0xf]
  %v333 = vld [vmem:[%s2 + $0x3c] sm:$0xff]
  %v334 = vld [vmem:[%s2 + $0x44] sm:$0xf]
  %v335 = vld [vmem:[%s2 + $0x48] sm:$0xff]
  %v336 = vld [vmem:[%s2 + $0x50] sm:$0xf]
  %v337 = vld [vmem:[%s2 + $0x54] sm:$0xff]
  %v338 = vld [vmem:[%s2 + $0x5c] sm:$0xf]
  %v339 = vld [vmem:[%s2 + $0x60] sm:$0xff]
  %v340 = vld [vmem:[%s2 + $0x68] sm:$0xf]
  %v341 = vld [vmem:[%s2 + $0x6c] sm:$0xff]
  %v342 = vld [vmem:[%s2 + $0x74] sm:$0xf]
  %v343 = vld [vmem:[%s2 + $0x78] sm:$0xff]
  %v344 = vld [vmem:[%s2 + $0x80] sm:$0xf]
  %v345 = vld [vmem:[%s2 + $0x84] sm:$0xff]
  %v346 = vld [vmem:[%s2 + $0x8c] sm:$0xf]
  %v347 = vld [vmem:[%s2 + $0x90] sm:$0xff]
  %v348 = vld [vmem:[%s2 + $0x98] sm:$0xf]
  %v349 = vld [vmem:[%s2 + $0x9c] sm:$0xff]
  %v350 = vld [vmem:[%s2 + $0xa4] sm:$0xf]
  %v351 = vld [vmem:[%s2 + $0xa8] sm:$0xff]
  %v352 = vld [vmem:[%s2 + $0xb0] sm:$0xf]
  %v353 = vld [vmem:[%s2 + $0xb4] sm:$0xff]
  %v354 = vld [vmem:[%s2 + $0xbc] sm:$0xf]
  %v387 = vunpack.c.l.b16 %v323
  %v388 = vunpack.c.h.b16 %v323
  %v389 = vunpack.c.l.b16 %v324
  %v390 = vunpack.c.l.b16 %v325
  %v391 = vunpack.c.h.b16 %v325
  %v392 = vunpack.c.l.b16 %v326
  %v393 = vunpack.c.l.b16 %v327
  %v394 = vunpack.c.h.b16 %v327
  %v395 = vunpack.c.l.b16 %v328
  %v396 = vunpack.c.l.b16 %v329
  %v397 = vunpack.c.h.b16 %v329
  %v398 = vunpack.c.l.b16 %v330
  %v399 = vunpack.c.l.b16 %v331
  %v400 = vunpack.c.h.b16 %v331
  %v401 = vunpack.c.l.b16 %v332
  %v402 = vunpack.c.l.b16 %v333
  %v403 = vunpack.c.h.b16 %v333
  %v404 = vunpack.c.l.b16 %v334
  %v405 = vunpack.c.l.b16 %v335
  %v406 = vunpack.c.h.b16 %v335
  %v407 = vunpack.c.l.b16 %v336
  %v408 = vunpack.c.l.b16 %v337
  %v409 = vunpack.c.h.b16 %v337
  %v410 = vunpack.c.l.b16 %v338
  %v411 = vunpack.c.l.b16 %v339
  %v412 = vunpack.c.h.b16 %v339
  %v413 = vunpack.c.l.b16 %v340
  %v414 = vunpack.c.l.b16 %v341
  %v415 = vunpack.c.h.b16 %v341
  %v416 = vunpack.c.l.b16 %v342
  %v417 = vunpack.c.l.b16 %v343
  %v418 = vunpack.c.h.b16 %v343
  %v419 = vunpack.c.l.b16 %v344
  %v420 = vunpack.c.l.b16 %v345
  %v421 = vunpack.c.h.b16 %v345
  %v422 = vunpack.c.l.b16 %v346
  %v423 = vunpack.c.l.b16 %v347
  %v424 = vunpack.c.h.b16 %v347
  %v425 = vunpack.c.l.b16 %v348
  %v426 = vunpack.c.l.b16 %v349
  %v427 = vunpack.c.h.b16 %v349
  %v428 = vunpack.c.l.b16 %v350
  %v429 = vunpack.c.l.b16 %v351
  %v430 = vunpack.c.h.b16 %v351
  %v431 = vunpack.c.l.b16 %v352
  %v432 = vunpack.c.l.b16 %v353
  %v433 = vunpack.c.h.b16 %v353
  %v434 = vunpack.c.l.b16 %v354
  %v435 = vpack.c.b16 %v390, %v387
  %v436 = vpack.c.b16 %v391, %v388
  %v437 = vpack.c.b16 %v392, %v389
  %v438 = vpack.c.b16 %v396, %v393
  %v439 = vpack.c.b16 %v397, %v394
  %v440 = vpack.c.b16 %v398, %v395
  %v441 = vpack.c.b16 %v402, %v399
  %v442 = vpack.c.b16 %v403, %v400
  %v443 = vpack.c.b16 %v404, %v401
  %v444 = vpack.c.b16 %v408, %v405
  %v445 = vpack.c.b16 %v409, %v406
  %v446 = vpack.c.b16 %v410, %v407
  %v447 = vpack.c.b16 %v414, %v411
  %v448 = vpack.c.b16 %v415, %v412
  %v449 = vpack.c.b16 %v416, %v413
  %v450 = vpack.c.b16 %v420, %v417
  %v451 = vpack.c.b16 %v421, %v418
  %v452 = vpack.c.b16 %v422, %v419
  %v453 = vpack.c.b16 %v426, %v423
  %v454 = vpack.c.b16 %v427, %v424
  %v455 = vpack.c.b16 %v428, %v425
  %v456 = vpack.c.b16 %v432, %v429
  %v457 = vpack.c.b16 %v433, %v430
  %v458 = vpack.c.b16 %v434, %v431
  %483 = vmatprep.subr.bf16.mxu0 %v436
  %484 = vmatpush1.bf16.msra.mxu0 %v435
  %485 = vmatprep.subr.bf16.mxu0 %v439
  %486 = vmatpush1.bf16.msra.mxu0 %v438
  %487 = vmatprep.subr.bf16.mxu0 %v442
  %488 = vmatpush1.bf16.msra.mxu0 %v441
  %489 = vmatprep.subr.bf16.mxu0 %v445
  %490 = vmatpush1.bf16.msra.mxu0 %v444
  %491 = vmatprep.subr.bf16.mxu0 %v448
  %492 = vmatpush1.bf16.msra.mxu0 %v447
  %493 = vmatprep.subr.bf16.mxu0 %v451
  %494 = vmatpush1.bf16.msra.mxu0 %v450
  %495 = vmatprep.subr.bf16.mxu0 %v454
  %496 = vmatpush1.bf16.msra.mxu0 %v453
  %497 = vmatprep.subr.bf16.mxu0 %v457
  %498 = vmatpush1.bf16.msra.mxu0 %v456
  %499 = vmatprep.subr.bf16.mxu0 0
  %500 = vmatpush1.bf16.msra.mxu0 0
  %501 = vmatprep.subr.bf16.mxu0 0
  %502 = vmatpush1.bf16.msra.mxu0 0
  %503 = vmatprep.subr.bf16.mxu0 0
  %504 = vmatpush1.bf16.msra.mxu0 0
  %505 = vmatprep.subr.bf16.mxu0 0
  %506 = vmatpush1.bf16.msra.mxu0 0
  %507 = vmatprep.subr.bf16.mxu0 0
  %508 = vmatpush1.bf16.msra.mxu0 0
  %509 = vmatprep.subr.bf16.mxu0 0
  %510 = vmatpush1.bf16.msra.mxu0 0
  %511 = vmatprep.subr.bf16.mxu0 0
  %512 = vmatpush1.bf16.msra.mxu0 0
  %513 = vmatprep.subr.bf16.mxu0 0
  %514 = vmatpush1.bf16.msra.mxu0 0
  %515 = vmatprep.mubr.bf16.mxu0 0
  %516 = vmatmul.mubr.bf16.gmra.mrb[0].mxu0 0
  %v517 = vpop.f32.mrb[0].mxu0
  %v518 = vadd.f32 0.0, %v517
  %v519 = vpop.f32.mrb[0].mxu0
  %v520 = vadd.f32 0.0, %v519
  %v521 = vpop.f32.mrb[0].mxu0
  %v522 = vpop.f32.mrb[0].mxu0
  %523 = vdwg.mxu0
  %524 = vmatprep.subr.bf16.mxu0 0
  %525 = vmatpush1.bf16.msra.mxu0 %v437
  %526 = vmatprep.subr.bf16.mxu0 0
  %527 = vmatpush1.bf16.msra.mxu0 %v440
  %528 = vmatprep.subr.bf16.mxu0 0
  %529 = vmatpush1.bf16.msra.mxu0 %v443
  %530 = vmatprep.subr.bf16.mxu0 0
  %531 = vmatpush1.bf16.msra.mxu0 %v446
  %532 = vmatprep.subr.bf16.mxu0 0
  %533 = vmatpush1.bf16.msra.mxu0 %v449
  %534 = vmatprep.subr.bf16.mxu0 0
  %535 = vmatpush1.bf16.msra.mxu0 %v452
  %536 = vmatprep.subr.bf16.mxu0 0
  %537 = vmatpush1.bf16.msra.mxu0 %v455
  %538 = vmatprep.subr.bf16.mxu0 0
  %539 = vmatpush1.bf16.msra.mxu0 %v458
  %540 = vmatprep.subr.bf16.mxu0 0
  %541 = vmatpush1.bf16.msra.mxu0 0
  %542 = vmatprep.subr.bf16.mxu0 0
  %543 = vmatpush1.bf16.msra.mxu0 0
  %544 = vmatprep.subr.bf16.mxu0 0
  %545 = vmatpush1.bf16.msra.mxu0 0
  %546 = vmatprep.subr.bf16.mxu0 0
  %547 = vmatpush1.bf16.msra.mxu0 0
  %548 = vmatprep.subr.bf16.mxu0 0
  %549 = vmatpush1.bf16.msra.mxu0 0
  %550 = vmatprep.subr.bf16.mxu0 0
  %551 = vmatpush1.bf16.msra.mxu0 0
  %552 = vmatprep.subr.bf16.mxu0 0
  %553 = vmatpush1.bf16.msra.mxu0 0
  %554 = vmatprep.subr.bf16.mxu0 0
  %555 = vmatpush1.bf16.msra.mxu0 0
  %556 = vmatprep.mubr.bf16.mxu0 0
  %557 = vmatmul.mubr.bf16.gmra.mrb[0].mxu0 0
  %v558 = vpop.f32.mrb[0].mxu0
  %v559 = vadd.f32 0.0, %v558
  %v560 = vpop.f32.mrb[0].mxu0
  %v561 = vpop.f32.mrb[0].mxu0
  %v562 = vpop.f32.mrb[0].mxu0
  %563 = vdwg.mxu0
  %v564 = vadd.f32 %v320, %v518
  %v565 = vxor.u32 %v564, 2147483648
  %v566 = vmul.f32 %v565, 1.442695
  %v567 = vpow.pop %v566
  %v568 = vadd.f32 %v567, 1.0
  %v569 = vrcp.pop %v568
  %v570 = vmul.f32 1.0, %v569
  %v571 = vadd.f32 %v321, %v520
  %v572 = vxor.u32 %v571, 2147483648
  %v573 = vmul.f32 %v572, 1.442695
  %v574 = vpow.pop %v573
  %v575 = vadd.f32 %v574, 1.0
  %v576 = vrcp.pop %v575
  %v577 = vmul.f32 1.0, %v576
  %v578 = vadd.f32 %v559, %v318
  %v579 = vmul.f32 %v570, %v578
  %v580 = vadd.f32 %v322, %v579
  %v581 = vtanh.pop %v580
  %v582 = vsub.f32 1.0, %v577
  %v583 = vmul.f32 %v582, %v581
  %v584 = vmul.f32 %v577, 0.0
  %v585 = vadd.f32 %v583, %v584
  %v586 = vld [vmem:[#allocation2 + $0x18] sm:$0xff]
  %v587 = vld [vmem:[#allocation2 + $0x20] sm:$0xff]
  %v588 = vld [vmem:[#allocation2 + $0x28] sm:$0xff]
  %v589 = vpack.c.bf16 %v585, %v585
  %590 = vmatprep.subr.bf16.mxu0 %v436
  %591 = vmatpush1.bf16.msra.mxu0 %v435
  %592 = vmatprep.subr.bf16.mxu0 %v439
  %593 = vmatpush1.bf16.msra.mxu0 %v438
  %594 = vmatprep.subr.bf16.mxu0 %v442
  %595 = vmatpush1.bf16.msra.mxu0 %v441
  %596 = vmatprep.subr.bf16.mxu0 %v445
  %597 = vmatpush1.bf16.msra.mxu0 %v444
  %598 = vmatprep.subr.bf16.mxu0 %v448
  %599 = vmatpush1.bf16.msra.mxu0 %v447
  %600 = vmatprep.subr.bf16.mxu0 %v451
  %601 = vmatpush1.bf16.msra.mxu0 %v450
  %602 = vmatprep.subr.bf16.mxu0 %v454
  %603 = vmatpush1.bf16.msra.mxu0 %v453
  %604 = vmatprep.subr.bf16.mxu0 %v457
  %605 = vmatpush1.bf16.msra.mxu0 %v456
  %606 = vmatprep.subr.bf16.mxu0 0
  %607 = vmatpush1.bf16.msra.mxu0 0
  %608 = vmatprep.subr.bf16.mxu0 0
  %609 = vmatpush1.bf16.msra.mxu0 0
  %610 = vmatprep.subr.bf16.mxu0 0
  %611 = vmatpush1.bf16.msra.mxu0 0
  %612 = vmatprep.subr.bf16.mxu0 0
  %613 = vmatpush1.bf16.msra.mxu0 0
  %614 = vmatprep.subr.bf16.mxu0 0
  %615 = vmatpush1.bf16.msra.mxu0 0
  %616 = vmatprep.subr.bf16.mxu0 0
  %617 = vmatpush1.bf16.msra.mxu0 0
  %618 = vmatprep.subr.bf16.mxu0 0
  %619 = vmatpush1.bf16.msra.mxu0 0
  %620 = vmatprep.subr.bf16.mxu0 0
  %621 = vmatpush1.bf16.msra.mxu0 0
  %622 = vmatprep.mubr.bf16.mxu0 0
  %623 = vmatmul.mubr.bf16.gmra.mrb[0].mxu0 %v589
  %v624 = vpop.f32.mrb[0].mxu0
  %v625 = vadd.f32 0.0, %v624
  %v626 = vpop.f32.mrb[0].mxu0
  %v627 = vadd.f32 0.0, %v626
  %v628 = vpop.f32.mrb[0].mxu0
  %v629 = vpop.f32.mrb[0].mxu0
  %630 = vdwg.mxu0
  %631 = vmatprep.subr.bf16.mxu0 0
  %632 = vmatpush1.bf16.msra.mxu0 %v437
  %633 = vmatprep.subr.bf16.mxu0 0
  %634 = vmatpush1.bf16.msra.mxu0 %v440
  %635 = vmatprep.subr.bf16.mxu0 0
  %636 = vmatpush1.bf16.msra.mxu0 %v443
  %637 = vmatprep.subr.bf16.mxu0 0
  %638 = vmatpush1.bf16.msra.mxu0 %v446
  %639 = vmatprep.subr.bf16.mxu0 0
  %640 = vmatpush1.bf16.msra.mxu0 %v449
  %641 = vmatprep.subr.bf16.mxu0 0
  %642 = vmatpush1.bf16.msra.mxu0 %v452
  %643 = vmatprep.subr.bf16.mxu0 0
  %644 = vmatpush1.bf16.msra.mxu0 %v455
  %645 = vmatprep.subr.bf16.mxu0 0
  %646 = vmatpush1.bf16.msra.mxu0 %v458
  %647 = vmatprep.subr.bf16.mxu0 0
  %648 = vmatpush1.bf16.msra.mxu0 0
  %649 = vmatprep.subr.bf16.mxu0 0
  %650 = vmatpush1.bf16.msra.mxu0 0
  %651 = vmatprep.subr.bf16.mxu0 0
  %652 = vmatpush1.bf16.msra.mxu0 0
  %653 = vmatprep.subr.bf16.mxu0 0
  %654 = vmatpush1.bf16.msra.mxu0 0
  %655 = vmatprep.subr.bf16.mxu0 0
  %656 = vmatpush1.bf16.msra.mxu0 0
  %657 = vmatprep.subr.bf16.mxu0 0
  %658 = vmatpush1.bf16.msra.mxu0 0
  %659 = vmatprep.subr.bf16.mxu0 0
  %660 = vmatpush1.bf16.msra.mxu0 0
  %661 = vmatprep.subr.bf16.mxu0 0
  %662 = vmatpush1.bf16.msra.mxu0 0
  %663 = vmatprep.mubr.bf16.mxu0 0
  %664 = vmatmul.mubr.bf16.gmra.mrb[0].mxu0 %v589
  %v665 = vpop.f32.mrb[0].mxu0
  %v666 = vadd.f32 0.0, %v665
  %v667 = vpop.f32.mrb[0].mxu0
  %v668 = vpop.f32.mrb[0].mxu0
  %v669 = vpop.f32.mrb[0].mxu0
  %670 = vdwg.mxu0
  %v671 = vadd.f32 %v586, %v625
  %v672 = vxor.u32 %v671, 2147483648
  %v673 = vmul.f32 %v672, 1.442695
  %v674 = vpow.pop %v673
  %v675 = vadd.f32 %v674, 1.0
  %v676 = vrcp.pop %v675
  %v677 = vmul.f32 1.0, %v676
  %v678 = vadd.f32 %v587, %v627
  %v679 = vxor.u32 %v678, 2147483648
  %v680 = vmul.f32 %v679, 1.442695
  %v681 = vpow.pop %v680
  %v682 = vadd.f32 %v681, 1.0
  %v683 = vrcp.pop %v682
  %v684 = vmul.f32 1.0, %v683
  %v685 = vadd.f32 %v666, %v318
  %v686 = vmul.f32 %v677, %v685
  %v687 = vadd.f32 %v588, %v686
  %v688 = vtanh.pop %v687
  %v689 = vsub.f32 1.0, %v684
  %v690 = vmul.f32 %v689, %v688
  %v691 = vmul.f32 %v684, %v585
  %v692 = vadd.f32 %v690, %v691
  %v693 = vld [vmem:[#allocation2 + $0x30] sm:$0xff]
  %v694 = vld [vmem:[#allocation2 + $0x38] sm:$0xff]
  %v695 = vld [vmem:[#allocation2 + $0x40] sm:$0xff]
  %v696 = vpack.c.bf16 %v692, %v692
  %697 = vmatprep.subr.bf16.mxu0 %v436
  %698 = vmatpush1.bf16.msra.mxu0 %v435
  %699 = vmatprep.subr.bf16.mxu0 %v439
  %700 = vmatpush1.bf16.msra.mxu0 %v438
  %701 = vmatprep.subr.bf16.mxu0 %v442
  %702 = vmatpush1.bf16.msra.mxu0 %v441
  %703 = vmatprep.subr.bf16.mxu0 %v445
  %704 = vmatpush1.bf16.msra.mxu0 %v444
  %705 = vmatprep.subr.bf16.mxu0 %v448
  %706 = vmatpush1.bf16.msra.mxu0 %v447
  %707 = vmatprep.subr.bf16.mxu0 %v451
  %708 = vmatpush1.bf16.msra.mxu0 %v450
  %709 = vmatprep.subr.bf16.mxu0 %v454
  %710 = vmatpush1.bf16.msra.mxu0 %v453
  %711 = vmatprep.subr.bf16.mxu0 %v457
  %712 = vmatpush1.bf16.msra.mxu0 %v456
  %713 = vmatprep.subr.bf16.mxu0 0
  %714 = vmatpush1.bf16.msra.mxu0 0
  %715 = vmatprep.subr.bf16.mxu0 0
  %716 = vmatpush1.bf16.msra.mxu0 0
  %717 = vmatprep.subr.bf16.mxu0 0
  %718 = vmatpush1.bf16.msra.mxu0 0
  %719 = vmatprep.subr.bf16.mxu0 0
  %720 = vmatpush1.bf16.msra.mxu0 0
  %721 = vmatprep.subr.bf16.mxu0 0
  %722 = vmatpush1.bf16.msra.mxu0 0
  %723 = vmatprep.subr.bf16.mxu0 0
  %724 = vmatpush1.bf16.msra.mxu0 0
  %725 = vmatprep.subr.bf16.mxu0 0
  %726 = vmatpush1.bf16.msra.mxu0 0
  %727 = vmatprep.subr.bf16.mxu0 0
  %728 = vmatpush1.bf16.msra.mxu0 0
  %729 = vmatprep.mubr.bf16.mxu0 0
  %730 = vmatmul.mubr.bf16.gmra.mrb[0].mxu0 %v696
  %v731 = vpop.f32.mrb[0].mxu0
  %v732 = vadd.f32 0.0, %v731
  %v733 = vpop.f32.mrb[0].mxu0
  %v734 = vadd.f32 0.0, %v733
  %v735 = vpop.f32.mrb[0].mxu0
  %v736 = vpop.f32.mrb[0].mxu0
  %737 = vdwg.mxu0
  %738 = vmatprep.subr.bf16.mxu0 0
  %739 = vmatpush1.bf16.msra.mxu0 %v437
  %740 = vmatprep.subr.bf16.mxu0 0
  %741 = vmatpush1.bf16.msra.mxu0 %v440
  %742 = vmatprep.subr.bf16.mxu0 0
  %743 = vmatpush1.bf16.msra.mxu0 %v443
  %744 = vmatprep.subr.bf16.mxu0 0
  %745 = vmatpush1.bf16.msra.mxu0 %v446
  %746 = vmatprep.subr.bf16.mxu0 0
  %747 = vmatpush1.bf16.msra.mxu0 %v449
  %748 = vmatprep.subr.bf16.mxu0 0
  %749 = vmatpush1.bf16.msra.mxu0 %v452
  %750 = vmatprep.subr.bf16.mxu0 0
  %751 = vmatpush1.bf16.msra.mxu0 %v455
  %752 = vmatprep.subr.bf16.mxu0 0
  %753 = vmatpush1.bf16.msra.mxu0 %v458
  %754 = vmatprep.subr.bf16.mxu0 0
  %755 = vmatpush1.bf16.msra.mxu0 0
  %756 = vmatprep.subr.bf16.mxu0 0
  %757 = vmatpush1.bf16.msra.mxu0 0
  %758 = vmatprep.subr.bf16.mxu0 0
  %759 = vmatpush1.bf16.msra.mxu0 0
  %760 = vmatprep.subr.bf16.mxu0 0
  %761 = vmatpush1.bf16.msra.mxu0 0
  %762 = vmatprep.subr.bf16.mxu0 0
  %763 = vmatpush1.bf16.msra.mxu0 0
  %764 = vmatprep.subr.bf16.mxu0 0
  %765 = vmatpush1.bf16.msra.mxu0 0
  %766 = vmatprep.subr.bf16.mxu0 0
  %767 = vmatpush1.bf16.msra.mxu0 0
  %768 = vmatprep.subr.bf16.mxu0 0
  %769 = vmatpush1.bf16.msra.mxu0 0
  %770 = vmatprep.mubr.bf16.mxu0 0
  %771 = vmatmul.mubr.bf16.gmra.mrb[0].mxu0 %v696
  %v772 = vpop.f32.mrb[0].mxu0
  %v773 = vadd.f32 0.0, %v772
  %v774 = vpop.f32.mrb[0].mxu0
  %v775 = vpop.f32.mrb[0].mxu0
  %v776 = vpop.f32.mrb[0].mxu0
  %777 = vdwg.mxu0
  %v778 = vadd.f32 %v693, %v732
  %v779 = vxor.u32 %v778, 2147483648
  %v780 = vmul.f32 %v779, 1.442695
  %v781 = vpow.pop %v780
  %v782 = vadd.f32 %v781, 1.0
  %v783 = vrcp.pop %v782
  %v784 = vmul.f32 1.0, %v783
  %v785 = vadd.f32 %v694, %v734
  %v786 = vxor.u32 %v785, 2147483648
  %v787 = vmul.f32 %v786, 1.442695
  %v788 = vpow.pop %v787
  %v789 = vadd.f32 %v788, 1.0
  %v790 = vrcp.pop %v789
  %v791 = vmul.f32 1.0, %v790
  %v792 = vadd.f32 %v773, %v318
  %v793 = vmul.f32 %v784, %v792
  %v794 = vadd.f32 %v695, %v793
  %v795 = vtanh.pop %v794
  %v796 = vsub.f32 1.0, %v791
  %v797 = vmul.f32 %v796, %v795
  %v798 = vmul.f32 %v791, %v692
  %v799 = vadd.f32 %v797, %v798
  %v800 = vld [vmem:[#allocation2 + $0x48] sm:$0xff]
  %v801 = vld [vmem:[#allocation2 + $0x50] sm:$0xff]
  %v802 = vld [vmem:[#allocation2 + $0x58] sm:$0xff]
  %v803 = vpack.c.bf16 %v799, %v799
  %804 = vmatprep.subr.bf16.mxu0 %v436
  %805 = vmatpush1.bf16.msra.mxu0 %v435
  %806 = vmatprep.subr.bf16.mxu0 %v439
  %807 = vmatpush1.bf16.msra.mxu0 %v438
  %808 = vmatprep.subr.bf16.mxu0 %v442
  %809 = vmatpush1.bf16.msra.mxu0 %v441
  %810 = vmatprep.subr.bf16.mxu0 %v445
  %811 = vmatpush1.bf16.msra.mxu0 %v444
  %812 = vmatprep.subr.bf16.mxu0 %v448
  %813 = vmatpush1.bf16.msra.mxu0 %v447
  %814 = vmatprep.subr.bf16.mxu0 %v451
  %815 = vmatpush1.bf16.msra.mxu0 %v450
  %816 = vmatprep.subr.bf16.mxu0 %v454
  %817 = vmatpush1.bf16.msra.mxu0 %v453
  %818 = vmatprep.subr.bf16.mxu0 %v457
  %819 = vmatpush1.bf16.msra.mxu0 %v456
  %820 = vmatprep.subr.bf16.mxu0 0
  %821 = vmatpush1.bf16.msra.mxu0 0
  %822 = vmatprep.subr.bf16.mxu0 0
  %823 = vmatpush1.bf16.msra.mxu0 0
  %824 = vmatprep.subr.bf16.mxu0 0
  %825 = vmatpush1.bf16.msra.mxu0 0
  %826 = vmatprep.subr.bf16.mxu0 0
  %827 = vmatpush1.bf16.msra.mxu0 0
  %828 = vmatprep.subr.bf16.mxu0 0
  %829 = vmatpush1.bf16.msra.mxu0 0
  %830 = vmatprep.subr.bf16.mxu0 0
  %831 = vmatpush1.bf16.msra.mxu0 0
  %832 = vmatprep.subr.bf16.mxu0 0
  %833 = vmatpush1.bf16.msra.mxu0 0
  %834 = vmatprep.subr.bf16.mxu0 0
  %835 = vmatpush1.bf16.msra.mxu0 0
  %836 = vmatprep.mubr.bf16.mxu0 0
  %837 = vmatmul.mubr.bf16.gmra.mrb[0].mxu0 %v803
  %v838 = vpop.f32.mrb[0].mxu0
  %v839 = vadd.f32 0.0, %v838
  %v840 = vpop.f32.mrb[0].mxu0
  %v841 = vadd.f32 0.0, %v840
  %v842 = vpop.f32.mrb[0].mxu0
  %v843 = vpop.f32.mrb[0].mxu0
  %844 = vdwg.mxu0
  %845 = vmatprep.subr.bf16.mxu0 0
  %846 = vmatpush1.bf16.msra.mxu0 %v437
  %847 = vmatprep.subr.bf16.mxu0 0
  %848 = vmatpush1.bf16.msra.mxu0 %v440
  %849 = vmatprep.subr.bf16.mxu0 0
  %850 = vmatpush1.bf16.msra.mxu0 %v443
  %851 = vmatprep.subr.bf16.mxu0 0
  %852 = vmatpush1.bf16.msra.mxu0 %v446
  %853 = vmatprep.subr.bf16.mxu0 0
  %854 = vmatpush1.bf16.msra.mxu0 %v449
  %855 = vmatprep.subr.bf16.mxu0 0
  %856 = vmatpush1.bf16.msra.mxu0 %v452
  %857 = vmatprep.subr.bf16.mxu0 0
  %858 = vmatpush1.bf16.msra.mxu0 %v455
  %859 = vmatprep.subr.bf16.mxu0 0
  %860 = vmatpush1.bf16.msra.mxu0 %v458
  %861 = vmatprep.subr.bf16.mxu0 0
  %862 = vmatpush1.bf16.msra.mxu0 0
  %863 = vmatprep.subr.bf16.mxu0 0
  %864 = vmatpush1.bf16.msra.mxu0 0
  %865 = vmatprep.subr.bf16.mxu0 0
  %866 = vmatpush1.bf16.msra.mxu0 0
  %867 = vmatprep.subr.bf16.mxu0 0
  %868 = vmatpush1.bf16.msra.mxu0 0
  %869 = vmatprep.subr.bf16.mxu0 0
  %870 = vmatpush1.bf16.msra.mxu0 0
  %871 = vmatprep.subr.bf16.mxu0 0
  %872 = vmatpush1.bf16.msra.mxu0 0
  %873 = vmatprep.subr.bf16.mxu0 0
  %874 = vmatpush1.bf16.msra.mxu0 0
  %875 = vmatprep.subr.bf16.mxu0 0
  %876 = vmatpush1.bf16.msra.mxu0 0
  %877 = vmatprep.mubr.bf16.mxu0 0
  %878 = vmatmul.mubr.bf16.gmra.mrb[0].mxu0 %v803
  %v879 = vpop.f32.mrb[0].mxu0
  %v880 = vadd.f32 0.0, %v879
  %v881 = vpop.f32.mrb[0].mxu0
  %v882 = vpop.f32.mrb[0].mxu0
  %v883 = vpop.f32.mrb[0].mxu0
  %884 = vdwg.mxu0
  %v885 = vadd.f32 %v800, %v839
  %v886 = vxor.u32 %v885, 2147483648
  %v887 = vmul.f32 %v886, 1.442695
  %v888 = vpow.pop %v887
  %v889 = vadd.f32 %v888, 1.0
  %v890 = vrcp.pop %v889
  %v891 = vmul.f32 1.0, %v890
  %v892 = vadd.f32 %v801, %v841
  %v893 = vxor.u32 %v892, 2147483648
  %v894 = vmul.f32 %v893, 1.442695
  %v895 = vpow.pop %v894
  %v896 = vadd.f32 %v895, 1.0
  %v897 = vrcp.pop %v896
  %v898 = vmul.f32 1.0, %v897
  %v899 = vadd.f32 %v880, %v318
  %v900 = vmul.f32 %v891, %v899
  %v901 = vadd.f32 %v802, %v900
  %v902 = vtanh.pop %v901
  %v903 = vsub.f32 1.0, %v898
  %v904 = vmul.f32 %v903, %v902
  %v905 = vmul.f32 %v898, %v799
  %v906 = vadd.f32 %v904, %v905
  %v907 = vld [vmem:[#allocation2 + $0x60] sm:$0xff]
  %v908 = vld [vmem:[#allocation2 + $0x68] sm:$0xff]
  %v909 = vld [vmem:[#allocation2 + $0x70] sm:$0xff]
  %v910 = vpack.c.bf16 %v906, %v906
  %911 = vmatprep.subr.bf16.mxu0 %v436
  %912 = vmatpush1.bf16.msra.mxu0 %v435
  %913 = vmatprep.subr.bf16.mxu0 %v439
  %914 = vmatpush1.bf16.msra.mxu0 %v438
  %915 = vmatprep.subr.bf16.mxu0 %v442
  %916 = vmatpush1.bf16.msra.mxu0 %v441
  %917 = vmatprep.subr.bf16.mxu0 %v445
  %918 = vmatpush1.bf16.msra.mxu0 %v444
  %919 = vmatprep.subr.bf16.mxu0 %v448
  %920 = vmatpush1.bf16.msra.mxu0 %v447
  %921 = vmatprep.subr.bf16.mxu0 %v451
  %922 = vmatpush1.bf16.msra.mxu0 %v450
  %923 = vmatprep.subr.bf16.mxu0 %v454
  %924 = vmatpush1.bf16.msra.mxu0 %v453
  %925 = vmatprep.subr.bf16.mxu0 %v457
  %926 = vmatpush1.bf16.msra.mxu0 %v456
  %927 = vmatprep.subr.bf16.mxu0 0
  %928 = vmatpush1.bf16.msra.mxu0 0
  %929 = vmatprep.subr.bf16.mxu0 0
  %930 = vmatpush1.bf16.msra.mxu0 0
  %931 = vmatprep.subr.bf16.mxu0 0
  %932 = vmatpush1.bf16.msra.mxu0 0
  %933 = vmatprep.subr.bf16.mxu0 0
  %934 = vmatpush1.bf16.msra.mxu0 0
  %935 = vmatprep.subr.bf16.mxu0 0
  %936 = vmatpush1.bf16.msra.mxu0 0
  %937 = vmatprep.subr.bf16.mxu0 0
  %938 = vmatpush1.bf16.msra.mxu0 0
  %939 = vmatprep.subr.bf16.mxu0 0
  %940 = vmatpush1.bf16.msra.mxu0 0
  %941 = vmatprep.subr.bf16.mxu0 0
  %942 = vmatpush1.bf16.msra.mxu0 0
  %943 = vmatprep.mubr.bf16.mxu0 0
  %944 = vmatmul.mubr.bf16.gmra.mrb[0].mxu0 %v910
  %v945 = vpop.f32.mrb[0].mxu0
  %v946 = vadd.f32 0.0, %v945
  %v947 = vpop.f32.mrb[0].mxu0
  %v948 = vadd.f32 0.0, %v947
  %v949 = vpop.f32.mrb[0].mxu0
  %v950 = vpop.f32.mrb[0].mxu0
  %951 = vdwg.mxu0
  %952 = vmatprep.subr.bf16.mxu0 0
  %953 = vmatpush1.bf16.msra.mxu0 %v437
  %954 = vmatprep.subr.bf16.mxu0 0
  %955 = vmatpush1.bf16.msra.mxu0 %v440
  %956 = vmatprep.subr.bf16.mxu0 0
  %957 = vmatpush1.bf16.msra.mxu0 %v443
  %958 = vmatprep.subr.bf16.mxu0 0
  %959 = vmatpush1.bf16.msra.mxu0 %v446
  %960 = vmatprep.subr.bf16.mxu0 0
  %961 = vmatpush1.bf16.msra.mxu0 %v449
  %962 = vmatprep.subr.bf16.mxu0 0
  %963 = vmatpush1.bf16.msra.mxu0 %v452
  %964 = vmatprep.subr.bf16.mxu0 0
  %965 = vmatpush1.bf16.msra.mxu0 %v455
  %966 = vmatprep.subr.bf16.mxu0 0
  %967 = vmatpush1.bf16.msra.mxu0 %v458
  %968 = vmatprep.subr.bf16.mxu0 0
  %969 = vmatpush1.bf16.msra.mxu0 0
  %970 = vmatprep.subr.bf16.mxu0 0
  %971 = vmatpush1.bf16.msra.mxu0 0
  %972 = vmatprep.subr.bf16.mxu0 0
  %973 = vmatpush1.bf16.msra.mxu0 0
  %974 = vmatprep.subr.bf16.mxu0 0
  %975 = vmatpush1.bf16.msra.mxu0 0
  %976 = vmatprep.subr.bf16.mxu0 0
  %977 = vmatpush1.bf16.msra.mxu0 0
  %978 = vmatprep.subr.bf16.mxu0 0
  %979 = vmatpush1.bf16.msra.mxu0 0
  %980 = vmatprep.subr.bf16.mxu0 0
  %981 = vmatpush1.bf16.msra.mxu0 0
  %982 = vmatprep.subr.bf16.mxu0 0
  %983 = vmatpush1.bf16.msra.mxu0 0
  %984 = vmatprep.mubr.bf16.mxu0 0
  %985 = vmatmul.mubr.bf16.gmra.mrb[0].mxu0 %v910
  %v986 = vpop.f32.mrb[0].mxu0
  %v987 = vadd.f32 0.0, %v986
  %v988 = vpop.f32.mrb[0].mxu0
  %v989 = vpop.f32.mrb[0].mxu0
  %v990 = vpop.f32.mrb[0].mxu0
  %991 = vdwg.mxu0
  %v992 = vadd.f32 %v907, %v946
  %v993 = vxor.u32 %v992, 2147483648
  %v994 = vmul.f32 %v993, 1.442695
  %v995 = vpow.pop %v994
  %v996 = vadd.f32 %v995, 1.0
  %v997 = vrcp.pop %v996
  %v998 = vmul.f32 1.0, %v997
  %v999 = vadd.f32 %v908, %v948
  %v1000 = vxor.u32 %v999, 2147483648
  %v1001 = vmul.f32 %v1000, 1.442695
  %v1002 = vpow.pop %v1001
  %v1003 = vadd.f32 %v1002, 1.0
  %v1004 = vrcp.pop %v1003
  %v1005 = vmul.f32 1.0, %v1004
  %v1006 = vadd.f32 %v987, %v318
  %v1007 = vmul.f32 %v998, %v1006
  %v1008 = vadd.f32 %v909, %v1007
  %v1009 = vtanh.pop %v1008
  %v1010 = vsub.f32 1.0, %v1005
  %v1011 = vmul.f32 %v1010, %v1009
  %v1012 = vmul.f32 %v1005, %v906
  %v1013 = vadd.f32 %v1011, %v1012
  %v1014 = vld [vmem:[#allocation2 + $0x78] sm:$0xff]
  %v1015 = vld [vmem:[#allocation2 + $0x80] sm:$0xff]
  %v1016 = vld [vmem:[#allocation2 + $0x88] sm:$0xff]
  %v1017 = vpack.c.bf16 %v1013, %v1013
  %1018 = vmatprep.subr.bf16.mxu0 %v436
  %1019 = vmatpush1.bf16.msra.mxu0 %v435
  %1020 = vmatprep.subr.bf16.mxu0 %v439
  %1021 = vmatpush1.bf16.msra.mxu0 %v438
  %1022 = vmatprep.subr.bf16.mxu0 %v442
  %1023 = vmatpush1.bf16.msra.mxu0 %v441
  %1024 = vmatprep.subr.bf16.mxu0 %v445
  %1025 = vmatpush1.bf16.msra.mxu0 %v444
  %1026 = vmatprep.subr.bf16.mxu0 %v448
  %1027 = vmatpush1.bf16.msra.mxu0 %v447
  %1028 = vmatprep.subr.bf16.mxu0 %v451
  %1029 = vmatpush1.bf16.msra.mxu0 %v450
  %1030 = vmatprep.subr.bf16.mxu0 %v454
  %1031 = vmatpush1.bf16.msra.mxu0 %v453
  %1032 = vmatprep.subr.bf16.mxu0 %v457
  %1033 = vmatpush1.bf16.msra.mxu0 %v456
  %1034 = vmatprep.subr.bf16.mxu0 0
  %1035 = vmatpush1.bf16.msra.mxu0 0
  %1036 = vmatprep.subr.bf16.mxu0 0
  %1037 = vmatpush1.bf16.msra.mxu0 0
  %1038 = vmatprep.subr.bf16.mxu0 0
  %1039 = vmatpush1.bf16.msra.mxu0 0
  %1040 = vmatprep.subr.bf16.mxu0 0
  %1041 = vmatpush1.bf16.msra.mxu0 0
  %1042 = vmatprep.subr.bf16.mxu0 0
  %1043 = vmatpush1.bf16.msra.mxu0 0
  %1044 = vmatprep.subr.bf16.mxu0 0
  %1045 = vmatpush1.bf16.msra.mxu0 0
  %1046 = vmatprep.subr.bf16.mxu0 0
  %1047 = vmatpush1.bf16.msra.mxu0 0
  %1048 = vmatprep.subr.bf16.mxu0 0
  %1049 = vmatpush1.bf16.msra.mxu0 0
  %1050 = vmatprep.mubr.bf16.mxu0 0
  %1051 = vmatmul.mubr.bf16.gmra.mrb[0].mxu0 %v1017
  %v1052 = vpop.f32.mrb[0].mxu0
  %v1053 = vadd.f32 0.0, %v1052
  %v1054 = vpop.f32.mrb[0].mxu0
  %v1055 = vadd.f32 0.0, %v1054
  %v1056 = vpop.f32.mrb[0].mxu0
  %v1057 = vpop.f32.mrb[0].mxu0
  %1058 = vdwg.mxu0
  %1059 = vmatprep.subr.bf16.mxu0 0
  %1060 = vmatpush1.bf16.msra.mxu0 %v437
  %1061 = vmatprep.subr.bf16.mxu0 0
  %1062 = vmatpush1.bf16.msra.mxu0 %v440
  %1063 = vmatprep.subr.bf16.mxu0 0
  %1064 = vmatpush1.bf16.msra.mxu0 %v443
  %1065 = vmatprep.subr.bf16.mxu0 0
  %1066 = vmatpush1.bf16.msra.mxu0 %v446
  %1067 = vmatprep.subr.bf16.mxu0 0
  %1068 = vmatpush1.bf16.msra.mxu0 %v449
  %1069 = vmatprep.subr.bf16.mxu0 0
  %1070 = vmatpush1.bf16.msra.mxu0 %v452
  %1071 = vmatprep.subr.bf16.mxu0 0
  %1072 = vmatpush1.bf16.msra.mxu0 %v455
  %1073 = vmatprep.subr.bf16.mxu0 0
  %1074 = vmatpush1.bf16.msra.mxu0 %v458
  %1075 = vmatprep.subr.bf16.mxu0 0
  %1076 = vmatpush1.bf16.msra.mxu0 0
  %1077 = vmatprep.subr.bf16.mxu0 0
  %1078 = vmatpush1.bf16.msra.mxu0 0
  %1079 = vmatprep.subr.bf16.mxu0 0
  %1080 = vmatpush1.bf16.msra.mxu0 0
  %1081 = vmatprep.subr.bf16.mxu0 0
  %1082 = vmatpush1.bf16.msra.mxu0 0
  %1083 = vmatprep.subr.bf16.mxu0 0
  %1084 = vmatpush1.bf16.msra.mxu0 0
  %1085 = vmatprep.subr.bf16.mxu0 0
  %1086 = vmatpush1.bf16.msra.mxu0 0
  %1087 = vmatprep.subr.bf16.mxu0 0
  %1088 = vmatpush1.bf16.msra.mxu0 0
  %1089 = vmatprep.subr.bf16.mxu0 0
  %1090 = vmatpush1.bf16.msra.mxu0 0
  %1091 = vmatprep.mubr.bf16.mxu0 0
  %1092 = vmatmul.mubr.bf16.gmra.mrb[0].mxu0 %v1017
  %v1093 = vpop.f32.mrb[0].mxu0
  %v1094 = vadd.f32 0.0, %v1093
  %v1095 = vpop.f32.mrb[0].mxu0
  %v1096 = vpop.f32.mrb[0].mxu0
  %v1097 = vpop.f32.mrb[0].mxu0
  %1098 = vdwg.mxu0
  %v1099 = vadd.f32 %v1014, %v1053
  %v1100 = vxor.u32 %v1099, 2147483648
  %v1101 = vmul.f32 %v1100, 1.442695
  %v1102 = vpow.pop %v1101
  %v1103 = vadd.f32 %v1102, 1.0
  %v1104 = vrcp.pop %v1103
  %v1105 = vmul.f32 1.0, %v1104
  %v1106 = vadd.f32 %v1015, %v1055
  %v1107 = vxor.u32 %v1106, 2147483648
  %v1108 = vmul.f32 %v1107, 1.442695
  %v1109 = vpow.pop %v1108
  %v1110 = vadd.f32 %v1109, 1.0
  %v1111 = vrcp.pop %v1110
  %v1112 = vmul.f32 1.0, %v1111
  %v1113 = vadd.f32 %v1094, %v318
  %v1114 = vmul.f32 %v1105, %v1113
  %v1115 = vadd.f32 %v1016, %v1114
  %v1116 = vtanh.pop %v1115
  %v1117 = vsub.f32 1.0, %v1112
  %v1118 = vmul.f32 %v1117, %v1116
  %v1119 = vmul.f32 %v1112, %v1013
  %v1120 = vadd.f32 %v1118, %v1119
  %v1121 = vld [vmem:[#allocation2 + $0x90] sm:$0xff]
  %v1122 = vld [vmem:[#allocation2 + $0x98] sm:$0xff]
  %v1123 = vld [vmem:[#allocation2 + $0xa0] sm:$0xff]
  %v1124 = vpack.c.bf16 %v1120, %v1120
  %1125 = vmatprep.subr.bf16.mxu0 %v436
  %1126 = vmatpush1.bf16.msra.mxu0 %v435
  %1127 = vmatprep.subr.bf16.mxu0 %v439
  %1128 = vmatpush1.bf16.msra.mxu0 %v438
  %1129 = vmatprep.subr.bf16.mxu0 %v442
  %1130 = vmatpush1.bf16.msra.mxu0 %v441
  %1131 = vmatprep.subr.bf16.mxu0 %v445
  %1132 = vmatpush1.bf16.msra.mxu0 %v444
  %1133 = vmatprep.subr.bf16.mxu0 %v448
  %1134 = vmatpush1.bf16.msra.mxu0 %v447
  %1135 = vmatprep.subr.bf16.mxu0 %v451
  %1136 = vmatpush1.bf16.msra.mxu0 %v450
  %1137 = vmatprep.subr.bf16.mxu0 %v454
  %1138 = vmatpush1.bf16.msra.mxu0 %v453
  %1139 = vmatprep.subr.bf16.mxu0 %v457
  %1140 = vmatpush1.bf16.msra.mxu0 %v456
  %1141 = vmatprep.subr.bf16.mxu0 0
  %1142 = vmatpush1.bf16.msra.mxu0 0
  %1143 = vmatprep.subr.bf16.mxu0 0
  %1144 = vmatpush1.bf16.msra.mxu0 0
  %1145 = vmatprep.subr.bf16.mxu0 0
  %1146 = vmatpush1.bf16.msra.mxu0 0
  %1147 = vmatprep.subr.bf16.mxu0 0
  %1148 = vmatpush1.bf16.msra.mxu0 0
  %1149 = vmatprep.subr.bf16.mxu0 0
  %1150 = vmatpush1.bf16.msra.mxu0 0
  %1151 = vmatprep.subr.bf16.mxu0 0
  %1152 = vmatpush1.bf16.msra.mxu0 0
  %1153 = vmatprep.subr.bf16.mxu0 0
  %1154 = vmatpush1.bf16.msra.mxu0 0
  %1155 = vmatprep.subr.bf16.mxu0 0
  %1156 = vmatpush1.bf16.msra.mxu0 0
  %1157 = vmatprep.mubr.bf16.mxu0 0
  %1158 = vmatmul.mubr.bf16.gmra.mrb[0].mxu0 %v1124
  %v1159 = vpop.f32.mrb[0].mxu0
  %v1160 = vadd.f32 0.0, %v1159
  %v1161 = vpop.f32.mrb[0].mxu0
  %v1162 = vadd.f32 0.0, %v1161
  %v1163 = vpop.f32.mrb[0].mxu0
  %v1164 = vpop.f32.mrb[0].mxu0
  %1165 = vdwg.mxu0
  %1166 = vmatprep.subr.bf16.mxu0 0
  %1167 = vmatpush1.bf16.msra.mxu0 %v437
  %1168 = vmatprep.subr.bf16.mxu0 0
  %1169 = vmatpush1.bf16.msra.mxu0 %v440
  %1170 = vmatprep.subr.bf16.mxu0 0
  %1171 = vmatpush1.bf16.msra.mxu0 %v443
  %1172 = vmatprep.subr.bf16.mxu0 0
  %1173 = vmatpush1.bf16.msra.mxu0 %v446
  %1174 = vmatprep.subr.bf16.mxu0 0
  %1175 = vmatpush1.bf16.msra.mxu0 %v449
  %1176 = vmatprep.subr.bf16.mxu0 0
  %1177 = vmatpush1.bf16.msra.mxu0 %v452
  %1178 = vmatprep.subr.bf16.mxu0 0
  %1179 = vmatpush1.bf16.msra.mxu0 %v455
  %1180 = vmatprep.subr.bf16.mxu0 0
  %1181 = vmatpush1.bf16.msra.mxu0 %v458
  %1182 = vmatprep.subr.bf16.mxu0 0
  %1183 = vmatpush1.bf16.msra.mxu0 0
  %1184 = vmatprep.subr.bf16.mxu0 0
  %1185 = vmatpush1.bf16.msra.mxu0 0
  %1186 = vmatprep.subr.bf16.mxu0 0
  %1187 = vmatpush1.bf16.msra.mxu0 0
  %1188 = vmatprep.subr.bf16.mxu0 0
  %1189 = vmatpush1.bf16.msra.mxu0 0
  %1190 = vmatprep.subr.bf16.mxu0 0
  %1191 = vmatpush1.bf16.msra.mxu0 0
  %1192 = vmatprep.subr.bf16.mxu0 0
  %1193 = vmatpush1.bf16.msra.mxu0 0
  %1194 = vmatprep.subr.bf16.mxu0 0
  %1195 = vmatpush1.bf16.msra.mxu0 0
  %1196 = vmatprep.subr.bf16.mxu0 0
  %1197 = vmatpush1.bf16.msra.mxu0 0
  %1198 = vmatprep.mubr.bf16.mxu0 0
  %1199 = vmatmul.mubr.bf16.gmra.mrb[0].mxu0 %v1124
  %v1200 = vpop.f32.mrb[0].mxu0
  %v1201 = vadd.f32 0.0, %v1200
  %v1202 = vpop.f32.mrb[0].mxu0
  %v1203 = vpop.f32.mrb[0].mxu0
  %v1204 = vpop.f32.mrb[0].mxu0
  %1205 = vdwg.mxu0
  %v1206 = vadd.f32 %v1121, %v1160
  %v1207 = vxor.u32 %v1206, 2147483648
  %v1208 = vmul.f32 %v1207, 1.442695
  %v1209 = vpow.pop %v1208
  %v1210 = vadd.f32 %v1209, 1.0
  %v1211 = vrcp.pop %v1210
  %v1212 = vmul.f32 1.0, %v1211
  %v1213 = vadd.f32 %v1122, %v1162
  %v1214 = vxor.u32 %v1213, 2147483648
  %v1215 = vmul.f32 %v1214, 1.442695
  %v1216 = vpow.pop %v1215
  %v1217 = vadd.f32 %v1216, 1.0
  %v1218 = vrcp.pop %v1217
  %v1219 = vmul.f32 1.0, %v1218
  %v1220 = vadd.f32 %v1201, %v318
  %v1221 = vmul.f32 %v1212, %v1220
  %v1222 = vadd.f32 %v1123, %v1221
  %v1223 = vtanh.pop %v1222
  %v1224 = vsub.f32 1.0, %v1219
  %v1225 = vmul.f32 %v1224, %v1223
  %v1226 = vmul.f32 %v1219, %v1120
  %v1227 = vadd.f32 %v1225, %v1226
  %v1228 = vld [vmem:[#allocation2 + $0xa8] sm:$0xff]
  %v1229 = vld [vmem:[#allocation2 + $0xb0] sm:$0xff]
  %v1230 = vld [vmem:[#allocation2 + $0xb8] sm:$0xff]
  %v1231 = vpack.c.bf16 %v1227, %v1227
  %1232 = vmatprep.subr.bf16.mxu0 %v436
  %1233 = vmatpush1.bf16.msra.mxu0 %v435
  %1234 = vmatprep.subr.bf16.mxu0 %v439
  %1235 = vmatpush1.bf16.msra.mxu0 %v438
  %1236 = vmatprep.subr.bf16.mxu0 %v442
  %1237 = vmatpush1.bf16.msra.mxu0 %v441
  %1238 = vmatprep.subr.bf16.mxu0 %v445
  %1239 = vmatpush1.bf16.msra.mxu0 %v444
  %1240 = vmatprep.subr.bf16.mxu0 %v448
  %1241 = vmatpush1.bf16.msra.mxu0 %v447
  %1242 = vmatprep.subr.bf16.mxu0 %v451
  %1243 = vmatpush1.bf16.msra.mxu0 %v450
  %1244 = vmatprep.subr.bf16.mxu0 %v454
  %1245 = vmatpush1.bf16.msra.mxu0 %v453
  %1246 = vmatprep.subr.bf16.mxu0 %v457
  %1247 = vmatpush1.bf16.msra.mxu0 %v456
  %1248 = vmatprep.subr.bf16.mxu0 0
  %1249 = vmatpush1.bf16.msra.mxu0 0
  %1250 = vmatprep.subr.bf16.mxu0 0
  %1251 = vmatpush1.bf16.msra.mxu0 0
  %1252 = vmatprep.subr.bf16.mxu0 0
  %1253 = vmatpush1.bf16.msra.mxu0 0
  %1254 = vmatprep.subr.bf16.mxu0 0
  %1255 = vmatpush1.bf16.msra.mxu0 0
  %1256 = vmatprep.subr.bf16.mxu0 0
  %1257 = vmatpush1.bf16.msra.mxu0 0
  %1258 = vmatprep.subr.bf16.mxu0 0
  %1259 = vmatpush1.bf16.msra.mxu0 0
  %1260 = vmatprep.subr.bf16.mxu0 0
  %1261 = vmatpush1.bf16.msra.mxu0 0
  %1262 = vmatprep.subr.bf16.mxu0 0
  %1263 = vmatpush1.bf16.msra.mxu0 0
  %1264 = vmatprep.mubr.bf16.mxu0 0
  %1265 = vmatmul.mubr.bf16.gmra.mrb[0].mxu0 %v1231
  %v1266 = vpop.f32.mrb[0].mxu0
  %v1267 = vadd.f32 0.0, %v1266
  %v1268 = vpop.f32.mrb[0].mxu0
  %v1269 = vadd.f32 0.0, %v1268
  %v1270 = vpop.f32.mrb[0].mxu0
  %v1271 = vpop.f32.mrb[0].mxu0
  %1272 = vdwg.mxu0
  %1273 = vmatprep.subr.bf16.mxu0 0
  %1274 = vmatpush1.bf16.msra.mxu0 %v437
  %1275 = vmatprep.subr.bf16.mxu0 0
  %1276 = vmatpush1.bf16.msra.mxu0 %v440
  %1277 = vmatprep.subr.bf16.mxu0 0
  %1278 = vmatpush1.bf16.msra.mxu0 %v443
  %1279 = vmatprep.subr.bf16.mxu0 0
  %1280 = vmatpush1.bf16.msra.mxu0 %v446
  %1281 = vmatprep.subr.bf16.mxu0 0
  %1282 = vmatpush1.bf16.msra.mxu0 %v449
  %1283 = vmatprep.subr.bf16.mxu0 0
  %1284 = vmatpush1.bf16.msra.mxu0 %v452
  %1285 = vmatprep.subr.bf16.mxu0 0
  %1286 = vmatpush1.bf16.msra.mxu0 %v455
  %1287 = vmatprep.subr.bf16.mxu0 0
  %1288 = vmatpush1.bf16.msra.mxu0 %v458
  %1289 = vmatprep.subr.bf16.mxu0 0
  %1290 = vmatpush1.bf16.msra.mxu0 0
  %1291 = vmatprep.subr.bf16.mxu0 0
  %1292 = vmatpush1.bf16.msra.mxu0 0
  %1293 = vmatprep.subr.bf16.mxu0 0
  %1294 = vmatpush1.bf16.msra.mxu0 0
  %1295 = vmatprep.subr.bf16.mxu0 0
  %1296 = vmatpush1.bf16.msra.mxu0 0
  %1297 = vmatprep.subr.bf16.mxu0 0
  %1298 = vmatpush1.bf16.msra.mxu0 0
  %1299 = vmatprep.subr.bf16.mxu0 0
  %1300 = vmatpush1.bf16.msra.mxu0 0
  %1301 = vmatprep.subr.bf16.mxu0 0
  %1302 = vmatpush1.bf16.msra.mxu0 0
  %1303 = vmatprep.subr.bf16.mxu0 0
  %1304 = vmatpush1.bf16.msra.mxu0 0
  %1305 = vmatprep.mubr.bf16.mxu0 0
  %1306 = vmatmul.mubr.bf16.gmra.mrb[0].mxu0 %v1231
  %v1307 = vpop.f32.mrb[0].mxu0
  %v1308 = vadd.f32 0.0, %v1307
  %v1309 = vpop.f32.mrb[0].mxu0
  %v1310 = vpop.f32.mrb[0].mxu0
  %v1311 = vpop.f32.mrb[0].mxu0
  %1312 = vdwg.mxu0
  %v1313 = vadd.f32 %v1228, %v1267
  %v1314 = vxor.u32 %v1313, 2147483648
  %v1315 = vmul.f32 %v1314, 1.442695
  %v1316 = vpow.pop %v1315
  %v1317 = vadd.f32 %v1316, 1.0
  %v1318 = vrcp.pop %v1317
  %v1319 = vmul.f32 1.0, %v1318
  %v1320 = vadd.f32 %v1229, %v1269
  %v1321 = vxor.u32 %v1320, 2147483648
  %v1322 = vmul.f32 %v1321, 1.442695
  %v1323 = vpow.pop %v1322
  %v1324 = vadd.f32 %v1323, 1.0
  %v1325 = vrcp.pop %v1324
  %v1326 = vmul.f32 1.0, %v1325
  %v1327 = vadd.f32 %v1308, %v318
  %v1328 = vmul.f32 %v1319, %v1327
  %v1329 = vadd.f32 %v1230, %v1328
  %v1330 = vtanh.pop %v1329
  %v1331 = vsub.f32 1.0, %v1326
  %v1332 = vmul.f32 %v1331, %v1330
  %v1333 = vmul.f32 %v1326, %v1227
  %v1334 = vadd.f32 %v1332, %v1333
  %v1335 = vld [vmem:[%s5] sm:$0xff]
  %vm1336 = vcmp.eq.f32.partialorder %v1335, 1.0
  %v1337 = vsel %vm1336, 1, 0
  %v1338 = vcvt.s32.f32 %v1337
  %v1339 = vsub.f32 1.0, %v1338
  %1341 = vrot.lane.b32.xlu0 %v1339, 5
  %v1342 = vpop.permute.xlu0 %1341
  %v1344 = vmul.f32 %v1338, %v1342
  %1346 = vset.pattern.permute.xlu0 0
  %1347 = vperm.xlu0 %1346, %v1338
  %v1348 = vpop.permute.xlu0 %1347
  %v1350 = vmul.f32 %v1334, %v1348
  %1352 = vset.pattern.permute.xlu0 5
  %1353 = vperm.xlu0 %1352, %v1344
  %v1354 = vpop.permute.xlu0 %1353
  %v1356 = vmul.f32 %v1334, %v1354
  %1358 = vrot.lane.b32.xlu0 %v1356, 64
  %v1359 = vpop.permute.xlu0 %1358
  %v1361 = vadd.f32 %v1350, %v1359
  %v1362 = vpack.c.bf16 %v1361, %v1361
  %v1363 = vld [vmem:[%s6] sm:$0xf]
  %v1364 = vld [vmem:[%s6 + $0x4] sm:$0xf]
  %v1365 = vld [vmem:[%s6 + $0x8] sm:$0xf]
  %v1366 = vld [vmem:[%s6 + $0xc] sm:$0xf]
  %v1367 = vld [vmem:[%s6 + $0x10] sm:$0xf]
  %v1368 = vld [vmem:[%s6 + $0x14] sm:$0xf]
  %v1369 = vld [vmem:[%s6 + $0x18] sm:$0xf]
  %v1370 = vld [vmem:[%s6 + $0x1c] sm:$0xf]
  %v1371 = vpack.c.bf16 %v1335, %v1335
  %v1372 = vld [vmem:[%s7] sm:$0x7]
  %vm1373 = vcmask 48128
  %v1375 = vsel %vm1373, %v1371, 0
  %vm1377 = vcmask 1042432
  %v1379 = vsel %vm1377, %v1372, 0
  %1381 = vmatprep.subr.bf16.mxu0 0
  %1382 = vmatpush1.bf16.msra.mxu0 %v1379
  %1383 = vmatprep.subr.bf16.mxu0 0
  %1384 = vmatpush1.bf16.msra.mxu0 0
  %1385 = vmatprep.subr.bf16.mxu0 0
  %1386 = vmatpush1.bf16.msra.mxu0 0
  %1387 = vmatprep.subr.bf16.mxu0 0
  %1388 = vmatpush1.bf16.msra.mxu0 0
  %1389 = vmatprep.subr.bf16.mxu0 0
  %1390 = vmatpush1.bf16.msra.mxu0 0
  %1391 = vmatprep.subr.bf16.mxu0 0
  %1392 = vmatpush1.bf16.msra.mxu0 0
  %1393 = vmatprep.subr.bf16.mxu0 0
  %1394 = vmatpush1.bf16.msra.mxu0 0
  %1395 = vmatprep.subr.bf16.mxu0 0
  %1396 = vmatpush1.bf16.msra.mxu0 0
  %1397 = vmatprep.subr.bf16.mxu0 0
  %1398 = vmatpush1.bf16.msra.mxu0 0
  %1399 = vmatprep.subr.bf16.mxu0 0
  %1400 = vmatpush1.bf16.msra.mxu0 0
  %1401 = vmatprep.subr.bf16.mxu0 0
  %1402 = vmatpush1.bf16.msra.mxu0 0
  %1403 = vmatprep.subr.bf16.mxu0 0
  %1404 = vmatpush1.bf16.msra.mxu0 0
  %1405 = vmatprep.subr.bf16.mxu0 0
  %1406 = vmatpush1.bf16.msra.mxu0 0
  %1407 = vmatprep.subr.bf16.mxu0 0
  %1408 = vmatpush1.bf16.msra.mxu0 0
  %1409 = vmatprep.subr.bf16.mxu0 0
  %1410 = vmatpush1.bf16.msra.mxu0 0
  %1411 = vmatprep.subr.bf16.mxu0 0
  %1412 = vmatpush1.bf16.msra.mxu0 0
  %1413 = vmatprep.mubr.bf16.mxu0 0
  %1414 = vmatmul.mubr.bf16.gmra.mrb[0].mxu0 %v1375
  %v1415 = vpop.f32.mrb[0].mxu0
  %v1416 = vadd.f32 0.0, %v1415
  %v1417 = vpop.f32.mrb[0].mxu0
  %v1418 = vpop.f32.mrb[0].mxu0
  %v1419 = vpop.f32.mrb[0].mxu0
  %1420 = vdwg.mxu0
  %v1429 = vunpack.c.l.b16 %v1363
  %v1430 = vunpack.c.l.b16 %v1364
  %v1431 = vunpack.c.l.b16 %v1365
  %v1432 = vunpack.c.l.b16 %v1366
  %v1433 = vunpack.c.l.b16 %v1367
  %v1434 = vunpack.c.l.b16 %v1368
  %v1435 = vunpack.c.l.b16 %v1369
  %v1436 = vunpack.c.l.b16 %v1370
  %v1437 = vpack.c.b16 %v1430, %v1429
  %v1438 = vpack.c.b16 %v1432, %v1431
  %v1439 = vpack.c.b16 %v1434, %v1433
  %v1440 = vpack.c.b16 %v1436, %v1435
  %vm1445 = vcmask 523264
  %v1447 = vsel %vm1445, %v1362, 0
  %1449 = vmatprep.subr.bf16.mxu0 0
  %1450 = vmatpush1.bf16.msra.mxu0 %v1437
  %1451 = vmatprep.subr.bf16.mxu0 0
  %1452 = vmatpush1.bf16.msra.mxu0 %v1438
  %1453 = vmatprep.subr.bf16.mxu0 0
  %1454 = vmatpush1.bf16.msra.mxu0 %v1439
  %1455 = vmatprep.subr.bf16.mxu0 0
  %1456 = vmatpush1.bf16.msra.mxu0 %v1440
  %1457 = vmatprep.subr.bf16.mxu0 0
  %1458 = vmatpush1.bf16.msra.mxu0 0
  %1459 = vmatprep.subr.bf16.mxu0 0
  %1460 = vmatpush1.bf16.msra.mxu0 0
  %1461 = vmatprep.subr.bf16.mxu0 0
  %1462 = vmatpush1.bf16.msra.mxu0 0
  %1463 = vmatprep.subr.bf16.mxu0 0
  %1464 = vmatpush1.bf16.msra.mxu0 0
  %1465 = vmatprep.subr.bf16.mxu0 0
  %1466 = vmatpush1.bf16.msra.mxu0 0
  %1467 = vmatprep.subr.bf16.mxu0 0
  %1468 = vmatpush1.bf16.msra.mxu0 0
  %1469 = vmatprep.subr.bf16.mxu0 0
  %1470 = vmatpush1.bf16.msra.mxu0 0
  %1471 = vmatprep.subr.bf16.mxu0 0
  %1472 = vmatpush1.bf16.msra.mxu0 0
  %1473 = vmatprep.subr.bf16.mxu0 0
  %1474 = vmatpush1.bf16.msra.mxu0 0
  %1475 = vmatprep.subr.bf16.mxu0 0
  %1476 = vmatpush1.bf16.msra.mxu0 0
  %1477 = vmatprep.subr.bf16.mxu0 0
  %1478 = vmatpush1.bf16.msra.mxu0 0
  %1479 = vmatprep.subr.bf16.mxu0 0
  %1480 = vmatpush1.bf16.msra.mxu0 0
  %1481 = vmatprep.mubr.bf16.mxu0 0
  %1482 = vmatmul.mubr.bf16.gmra.mrb[0].mxu0 %v1447
  %v1483 = vpop.f32.mrb[0].mxu0
  %v1484 = vadd.f32 %v1416, %v1483
  %v1485 = vpop.f32.mrb[0].mxu0
  %v1486 = vpop.f32.mrb[0].mxu0
  %v1487 = vpop.f32.mrb[0].mxu0
  %1488 = vdwg.mxu0
  %v1489 = vld [vmem:[%s8] sm:$0x1]
  %v1491 = vlaneseq
  %v1492 = vshrl.u32 %v1491, 7
  %v1493 = vsub.s32 0, %v1492
  %v1494 = vrot.slane %v1489, %v1493
  %v1496 = vadd.f32 %v1484, %v1494
  %v1497 = vmax.f32 %v1496, 0.0
  %v1498 = vpack.c.bf16 %v1497, %v1497
  %v1499 = vld [vmem:[%s9] sm:$0xf]
  %v1500 = vld [vmem:[%s9 + $0x4] sm:$0xf]
  %v1501 = vld [vmem:[%s9 + $0x8] sm:$0xf]
  %v1502 = vld [vmem:[%s9 + $0xc] sm:$0xf]
  %v1503 = vld [vmem:[%s9 + $0x10] sm:$0xf]
  %v1504 = vld [vmem:[%s9 + $0x14] sm:$0xf]
  %v1505 = vld [vmem:[%s9 + $0x18] sm:$0xf]
  %v1506 = vld [vmem:[%s9 + $0x1c] sm:$0xf]
  %v1507 = vld [vmem:[%s9 + $0x20] sm:$0xf]
  %v1508 = vld [vmem:[%s9 + $0x24] sm:$0xf]
  %v1509 = vld [vmem:[%s9 + $0x28] sm:$0xf]
  %v1510 = vld [vmem:[%s9 + $0x2c] sm:$0xf]
  %v1511 = vld [vmem:[%s9 + $0x30] sm:$0xf]
  %v1512 = vld [vmem:[%s9 + $0x34] sm:$0xf]
  %v1513 = vld [vmem:[%s9 + $0x38] sm:$0xf]
  %v1514 = vld [vmem:[%s9 + $0x3c] sm:$0xf]
  %v1515 = vld [vmem:[%s10] sm:$0x1]
  %v1517 = vlaneseq
  %v1518 = vshrl.u32 %v1517, 7
  %v1519 = vsub.s32 0, %v1518
  %v1520 = vrot.slane %v1515, %v1519
  %v1538 = vunpack.c.l.b16 %v1499
  %v1539 = vunpack.c.l.b16 %v1500
  %v1540 = vunpack.c.l.b16 %v1501
  %v1541 = vunpack.c.l.b16 %v1502
  %v1542 = vunpack.c.l.b16 %v1503
  %v1543 = vunpack.c.l.b16 %v1504
  %v1544 = vunpack.c.l.b16 %v1505
  %v1545 = vunpack.c.l.b16 %v1506
  %v1546 = vunpack.c.l.b16 %v1507
  %v1547 = vunpack.c.l.b16 %v1508
  %v1548 = vunpack.c.l.b16 %v1509
  %v1549 = vunpack.c.l.b16 %v1510
  %v1550 = vunpack.c.l.b16 %v1511
  %v1551 = vunpack.c.l.b16 %v1512
  %v1552 = vunpack.c.l.b16 %v1513
  %v1553 = vunpack.c.l.b16 %v1514
  %v1554 = vpack.c.b16 %v1539, %v1538
  %v1555 = vpack.c.b16 %v1541, %v1540
  %v1556 = vpack.c.b16 %v1543, %v1542
  %v1557 = vpack.c.b16 %v1545, %v1544
  %v1558 = vpack.c.b16 %v1547, %v1546
  %v1559 = vpack.c.b16 %v1549, %v1548
  %v1560 = vpack.c.b16 %v1551, %v1550
  %v1561 = vpack.c.b16 %v1553, %v1552
  %1570 = vmatprep.subr.bf16.mxu0 0
  %1571 = vmatpush1.bf16.msra.mxu0 %v1554
  %1572 = vmatprep.subr.bf16.mxu0 0
  %1573 = vmatpush1.bf16.msra.mxu0 %v1555
  %1574 = vmatprep.subr.bf16.mxu0 0
  %1575 = vmatpush1.bf16.msra.mxu0 %v1556
  %1576 = vmatprep.subr.bf16.mxu0 0
  %1577 = vmatpush1.bf16.msra.mxu0 %v1557
  %1578 = vmatprep.subr.bf16.mxu0 0
  %1579 = vmatpush1.bf16.msra.mxu0 %v1558
  %1580 = vmatprep.subr.bf16.mxu0 0
  %1581 = vmatpush1.bf16.msra.mxu0 %v1559
  %1582 = vmatprep.subr.bf16.mxu0 0
  %1583 = vmatpush1.bf16.msra.mxu0 %v1560
  %1584 = vmatprep.subr.bf16.mxu0 0
  %1585 = vmatpush1.bf16.msra.mxu0 %v1561
  %1586 = vmatprep.subr.bf16.mxu0 0
  %1587 = vmatpush1.bf16.msra.mxu0 0
  %1588 = vmatprep.subr.bf16.mxu0 0
  %1589 = vmatpush1.bf16.msra.mxu0 0
  %1590 = vmatprep.subr.bf16.mxu0 0
  %1591 = vmatpush1.bf16.msra.mxu0 0
  %1592 = vmatprep.subr.bf16.mxu0 0
  %1593 = vmatpush1.bf16.msra.mxu0 0
  %1594 = vmatprep.subr.bf16.mxu0 0
  %1595 = vmatpush1.bf16.msra.mxu0 0
  %1596 = vmatprep.subr.bf16.mxu0 0
  %1597 = vmatpush1.bf16.msra.mxu0 0
  %1598 = vmatprep.subr.bf16.mxu0 0
  %1599 = vmatpush1.bf16.msra.mxu0 0
  %1600 = vmatprep.subr.bf16.mxu0 0
  %1601 = vmatpush1.bf16.msra.mxu0 0
  %1602 = vmatprep.mubr.bf16.mxu0 0
  %1603 = vmatmul.mubr.bf16.gmra.mrb[0].mxu0 %v1498
  %v1604 = vpop.f32.mrb[0].mxu0
  %v1605 = vadd.f32 %v1520, %v1604
  %v1606 = vpop.f32.mrb[0].mxu0
  %v1607 = vpop.f32.mrb[0].mxu0
  %v1608 = vpop.f32.mrb[0].mxu0
  %1609 = vdwg.mxu0
  %1610 = vst [vmem:[%s11] sm:$0xff] %v1605
  // Predicated region
  $region46: #{_forward.1} parent=0 // pred_check
    _
  $region47: #{_forward.1} parent=0 // pred_check_branch
    %1612 = sbr.rel (0) target = $region49
  $region48: #{_forward.1} parent=0 // pred_region
    _
  $region49: #{_forward.1} parent=0 // pred_fallthru
    _
  // Predicated region
  $region50: #{_forward.1} parent=0 // pred_check
    _
  $region51: #{_forward.1} parent=0 // pred_check_branch
    %1614 = sbr.rel (0) target = $region53
  $region52: #{_forward.1} parent=0 // pred_region
    _
  $region53: #{_forward.1} parent=0 // pred_fallthru
    _

</llo_original>
